<compile_context>
chip_gen: v7x
topology: tpu7x:2x2x1
jax: 0.10.0
libtpu: 0.0.40
codegen_flags: <defaults>
</compile_context>

<pallas_src>
import functools

import numpy as np
import jax
import jax.numpy as jnp
from jax import lax
from jax.experimental import pallas as pl
from jax.experimental.pallas import tpu as pltpu

N_QUBITS = 4
DIM = 2 ** N_QUBITS          # 16
N_LAYERS = 1
LANE = 128


# ----------------------------------------------------------------------------
# Host-side glue (parameter setup only): build the fixed 16x16 entangling unitary.
# ----------------------------------------------------------------------------
def _rx(t):
    c, s = np.cos(t / 2), np.sin(t / 2)
    return np.array([[c, -1j * s], [-1j * s, c]], dtype=np.complex128)


def _ry(t):
    c, s = np.cos(t / 2), np.sin(t / 2)
    return np.array([[c, -s], [s, c]], dtype=np.complex128)


def _rz(t):
    return np.array([[np.exp(-1j * t / 2), 0.0], [0.0, np.exp(1j * t / 2)]],
                    dtype=np.complex128)


def _rot(phi, theta, omega):
    # PennyLane Rot(phi, theta, omega) = RZ(omega) RY(theta) RZ(phi)
    return _rz(omega) @ _ry(theta) @ _rz(phi)


def _kron_all(mats):
    out = np.array([[1.0 + 0j]])
    for m in mats:
        out = np.kron(out, m)
    return out


def _cnot_full(control, target, n=N_QUBITS):
    dim = 2 ** n
    U = np.zeros((dim, dim), dtype=np.complex128)
    for k in range(dim):
        cbit = (k >> (n - 1 - control)) & 1
        j = k ^ (1 << (n - 1 - target)) if cbit else k
        U[j, k] = 1.0
    return U


def build_entangler(weights):
    """weights: (n_layers, n_qubits, 3). Returns the 16x16 StronglyEntanglingLayers unitary."""
    V = np.eye(DIM, dtype=np.complex128)
    for l in range(weights.shape[0]):
        rots = [_rot(*weights[l, i]) for i in range(N_QUBITS)]
        V = _kron_all(rots) @ V
        r = (l % (N_QUBITS - 1)) + 1              # PennyLane default ranges
        for i in range(N_QUBITS):
            V = _cnot_full(i, (i + r) % N_QUBITS) @ V
    return V


def build_kernel_constants(V):
    """Fold the RX-embedding phase into V and build the real-valued kernel operands
    (batch-on-lanes layout).  Returns (b_sel(64,8), w_stack(32,16), z2(4,32), bits)."""
    ks = np.arange(DIM)
    # bit of qubit i in basis index k (wire 0 = most significant, PennyLane convention)
    bits = np.stack([(ks >> (N_QUBITS - 1 - i)) & 1 for i in range(N_QUBITS)],
                    axis=1).astype(np.float64)                      # (16, 4)
    pops = bits.sum(axis=1)
    phase = np.array([(-1j) ** int(p) for p in pops])               # (-i)^popcount(k)
    Vp = V * phase[None, :]                                         # fold phase into columns

    # stacked [Re(Vp); Im(Vp)] so psi_r/psi_i come from ONE matmul: (32,16) @ (16,L)
    w_stack = np.vstack([np.real(Vp), np.imag(Vp)]).astype(np.float32)      # (32, 16)

    # fused <Z> reduction: out = z2 @ [psi_r^2 ; psi_i^2], z2 = [zsignT | zsignT]
    zsign = (1.0 - 2.0 * bits)                                              # (16, 4)
    z2 = np.hstack([zsign.T, zsign.T]).astype(np.float32)                   # (4, 32)

    # selection matrix turning cs=[c0..c3,s0..s3] (8,L) into the 4 per-qubit factor
    # stacks f_i (16,L):  f[i*16+k] = (1-bit_i(k))*c_i + bit_i(k)*s_i
    b_sel = np.zeros((N_QUBITS * DIM, 2 * N_QUBITS), dtype=np.float64)
    for i in range(N_QUBITS):
        for k in range(DIM):
            b = bits[k, i]
            b_sel[i * DIM + k, i] = 1.0 - b
            b_sel[i * DIM + k, N_QUBITS + i] = b
    b_sel = b_sel.astype(np.float32)                                        # (64, 8)

    return jnp.asarray(b_sel), jnp.asarray(w_stack), jnp.asarray(z2), bits


# ----------------------------------------------------------------------------
# Pallas kernel
# ----------------------------------------------------------------------------
def _compute_tile(xc, b_sel, w_stack, z2):
    """xc: (4, L) angles with batch on lanes -> (4, L) Pauli-Z expectations."""
    half = 0.5 * xc
    cs = jnp.concatenate([jnp.cos(half), jnp.sin(half)], axis=0)       # (8, L)
    # All cos/sin "broadcast + select by basis-state bit" work goes to the MXU:
    f = jnp.dot(b_sel, cs, preferred_element_type=jnp.float32,
                precision=lax.Precision.HIGHEST)                        # (64, L)
    m = (f[0:DIM] * f[DIM:2 * DIM]) * (f[2 * DIM:3 * DIM] * f[3 * DIM:4 * DIM])  # (16, L)
    psi = jnp.dot(w_stack, m, preferred_element_type=jnp.float32,
                  precision=lax.Precision.HIGHEST)                      # (32, L) = [Re; Im]
    return jnp.dot(z2, psi * psi, preferred_element_type=jnp.float32,
                   precision=lax.Precision.HIGHEST)                     # (4, L)


def quantum_layer_kernel(x_ref, bsel_ref, w_ref, z2_ref, out_ref, *, chunk, n_chunks):
    b_sel = bsel_ref[...]                        # (64, 8)  resident constants
    w_stack = w_ref[...]                         # (32, 16)
    z2 = z2_ref[...]                             # (4, 32)

    if n_chunks == 1:
        out_ref[...] = _compute_tile(x_ref[...], b_sel, w_stack, z2)
    else:
        # Inner loop over lane sub-chunks: big tile for DMA / grid-step amortization,
        # small chunk for vreg/VMEM footprint of the (64,.)/(32,.) intermediates.
        @pl.loop(0, n_chunks)
        def _(ci):
            off = pl.multiple_of(ci * chunk, chunk)
            out_ref[:, pl.ds(off, chunk)] = _compute_tile(
                x_ref[:, pl.ds(off, chunk)], b_sel, w_stack, z2)


def _round_up(n, m):
    return (n + m - 1) // m * m


def quantum_layer(x, b_sel, w_stack, z2, *, block_b=32768, chunk=512):
    """x: (B, n_qubits) angles -> (B, n_qubits) Pauli-Z expectations."""
    B = x.shape[0]

    b_lanes = _round_up(B, LANE)
    tb = min(_round_up(block_b, LANE), b_lanes)            # lane-aligned batch tile
    # If one tile would cover the whole batch, split it so the "parallel" grid axis
    # has >=2 steps and both v7x TensorCores get work (harmless on v5e/v6e).
    if tb >= b_lanes and b_lanes >= 2 * LANE:
        tb = _round_up(b_lanes // 2, LANE)
    chunk_eff = min(chunk, tb)                              # inner-loop lane sub-chunk
    tb = _round_up(tb, chunk_eff)                           # tile is a whole number of chunks
    Bp = _round_up(B, tb)                                   # pad so no tail is dropped
    n_chunks = tb // chunk_eff

    # Batch-on-lanes layout; pad columns are cos(0)/sin(0) -> finite, sliced off below.
    # (Single cheap XLA copy; callers keeping activations in (4,B) layout can skip it.)
    xT = jnp.transpose(x.astype(jnp.float32))               # (4, B)
    if Bp != B:
        xT = jnp.pad(xT, ((0, 0), (0, Bp - B)))

    cost = pl.CostEstimate(
        flops=int(2400 * Bp),
        transcendentals=int(2 * N_QUBITS * Bp),
        bytes_accessed=int(2 * N_QUBITS * 4 * Bp
                           + (b_sel.size + w_stack.size + z2.size) * 4),
    )

    grid_spec = pltpu.PrefetchScalarGridSpec(
        num_scalar_prefetch=0,
        grid=(Bp // tb,),
        in_specs=[
            pl.BlockSpec((N_QUBITS, tb), lambda b: (0, b)),          # x tile, lane-dense
            pl.BlockSpec((N_QUBITS * DIM, 2 * N_QUBITS), lambda b: (0, 0)),  # b_sel  (resident)
            pl.BlockSpec((2 * DIM, DIM), lambda b: (0, 0)),          # w_stack (resident)
            pl.BlockSpec((N_QUBITS, 2 * DIM), lambda b: (0, 0)),     # z2      (resident)
        ],
        out_specs=pl.BlockSpec((N_QUBITS, tb), lambda b: (0, b)),
    )

    kernel = functools.partial(quantum_layer_kernel, chunk=chunk_eff, n_chunks=n_chunks)

    outT = pl.pallas_call(
        kernel,
        out_shape=jax.ShapeDtypeStruct((N_QUBITS, Bp), jnp.float32),
        grid_spec=grid_spec,
        compiler_params=pltpu.CompilerParams(dimension_semantics=("parallel",)),
        cost_estimate=cost,
    )(xT, b_sel, w_stack, z2)

    return jnp.transpose(outT[:, :B])                                # (B, 4)


# ----------------------------------------------------------------------------
# Pure-numpy reference (full statevector simulation) for a correctness check.
# ----------------------------------------------------------------------------
def reference(x_np, V, bits_np):
    B = x_np.shape[0]
    zsigns = 1.0 - 2.0 * bits_np                  # (16, 4)
    out = np.zeros((B, N_QUBITS))
    for b in range(B):
        psi = np.array([1.0 + 0j])
        for i in range(N_QUBITS):
            psi = np.kron(psi, _rx(x_np[b, i]) @ np.array([1.0, 0.0], dtype=np.complex128))
        psi = V @ psi
        probs = np.abs(psi) ** 2
        out[b] = probs @ zsigns
    return out


if __name__ == "__main__":
    key = jax.random.PRNGKey(0)
    kx, kw, kx2 = jax.random.split(key, 3)

    # TorchLayer default weight init is Uniform(0, 2*pi); deterministic synthetic init here.
    weights = np.asarray(
        jax.random.uniform(kw, (N_LAYERS, N_QUBITS, 3), dtype=jnp.float32,
                           minval=0.0, maxval=float(2.0 * np.pi)),
        dtype=np.float64)

    V = build_entangler(weights)
    b_sel, w_stack, z2, bits_np = build_kernel_constants(V)

    # --- small, module-consistent shape: (batch=8, n_qubits=4); single-tile path ---
    B = 8
    x = jax.random.uniform(kx, (B, N_QUBITS), dtype=jnp.float32,
                           minval=0.0, maxval=float(np.pi))
    out = jax.block_until_ready(quantum_layer(x, b_sel, w_stack, z2))
    ref = reference(np.asarray(x, dtype=np.float64), V, bits_np)
    assert out.shape == (B, N_QUBITS)
    assert np.allclose(np.asarray(out), ref, atol=1e-4), (
        f"mismatch (B={B}):\nkernel=\n{np.asarray(out)}\nref=\n{ref}")

    # --- exercise the multi-grid-step + inner-chunk-loop path on a modest batch ---
    B2 = 1000
    x2 = jax.random.uniform(kx2, (B2, N_QUBITS), dtype=jnp.float32,
                            minval=0.0, maxval=float(np.pi))
    out2 = jax.block_until_ready(
        quantum_layer(x2, b_sel, w_stack, z2, block_b=1024, chunk=256))
    ref2 = reference(np.asarray(x2, dtype=np.float64), V, bits_np)
    assert out2.shape == (B2, N_QUBITS)
    assert np.allclose(np.asarray(out2), ref2, atol=1e-4), (
        f"mismatch (B={B2}): max abs err = "
        f"{np.max(np.abs(np.asarray(out2) - ref2))}")

    print("KERNEL_OK")
</pallas_src>

<mosaic_0001>
module attributes {stable_mosaic.version = 11 : i64} {
  func.func @quantum_layer_kernel(%arg0: i32, %arg1: memref<4x128xf32, #tpu.memory_space<vmem>>, %arg2: memref<64x8xf32, #tpu.memory_space<vmem>>, %arg3: memref<32x16xf32, #tpu.memory_space<vmem>>, %arg4: memref<4x32xf32, #tpu.memory_space<vmem>>, %arg5: memref<4x128xf32, #tpu.memory_space<vmem>>) attributes {dimension_semantics = [#tpu.dimension_semantics<parallel>], iteration_bounds = array<i64: 1>, scalar_prefetch = 0 : i64, scratch_operands = 0 : i64, tpu.core_type = #tpu.core_type<tc>, window_params = [{transform_indices = @transform_0, window_bounds = array<i64: 4, 128>}, {pipeline_mode = #tpu.pipeline_mode<synchronous>, transform_indices = @transform_1, window_bounds = array<i64: 64, 8>}, {pipeline_mode = #tpu.pipeline_mode<synchronous>, transform_indices = @transform_2, window_bounds = array<i64: 32, 16>}, {pipeline_mode = #tpu.pipeline_mode<synchronous>, transform_indices = @transform_3, window_bounds = array<i64: 4, 32>}, {transform_indices = @transform_4, window_bounds = array<i64: 4, 128>}]} {
    %c0 = arith.constant 0 : index
    %c0_0 = arith.constant 0 : index
    %0 = vector.load %arg2[%c0, %c0_0] : memref<64x8xf32, #tpu.memory_space<vmem>>, vector<64x8xf32>
    %c0_1 = arith.constant 0 : index
    %c0_2 = arith.constant 0 : index
    %1 = vector.load %arg3[%c0_1, %c0_2] : memref<32x16xf32, #tpu.memory_space<vmem>>, vector<32x16xf32>
    %c0_3 = arith.constant 0 : index
    %c0_4 = arith.constant 0 : index
    %2 = vector.load %arg4[%c0_3, %c0_4] : memref<4x32xf32, #tpu.memory_space<vmem>>, vector<4x32xf32>
    %c0_5 = arith.constant 0 : index
    %c0_6 = arith.constant 0 : index
    %3 = vector.load %arg1[%c0_5, %c0_6] : memref<4x128xf32, #tpu.memory_space<vmem>>, vector<4x128xf32>
    %cst = arith.constant 5.000000e-01 : f32
    %4 = vector.broadcast %cst : f32 to vector<4x128xf32>
    %5 = arith.mulf %4, %3 : vector<4x128xf32>
    %6 = math.cos %5 : vector<4x128xf32>
    %7 = math.sin %5 : vector<4x128xf32>
    %8 = tpu.concatenate %6, %7 in 0 : vector<4x128xf32>, vector<4x128xf32> -> vector<8x128xf32>
    %cst_7 = arith.constant dense<0.000000e+00> : vector<64x128xf32>
    %9 = tpu.matmul %0, %8, %cst_7 {dimension_numbers = #tpu.dot_dimension_numbers<[1], [0], [0], [1], [0, 0, 1, 1], [], []>, precision = #tpu.contract_precision<fp32>} : vector<64x8xf32>, vector<8x128xf32>, vector<64x128xf32> -> vector<64x128xf32>
    %10 = vector.extract_strided_slice %9 {offsets = [0, 0], sizes = [16, 128], strides = [1, 1]} : vector<64x128xf32> to vector<16x128xf32>
    %11 = vector.extract_strided_slice %9 {offsets = [16, 0], sizes = [16, 128], strides = [1, 1]} : vector<64x128xf32> to vector<16x128xf32>
    %12 = arith.mulf %10, %11 : vector<16x128xf32>
    %13 = vector.extract_strided_slice %9 {offsets = [32, 0], sizes = [16, 128], strides = [1, 1]} : vector<64x128xf32> to vector<16x128xf32>
    %14 = vector.extract_strided_slice %9 {offsets = [48, 0], sizes = [16, 128], strides = [1, 1]} : vector<64x128xf32> to vector<16x128xf32>
    %15 = arith.mulf %13, %14 : vector<16x128xf32>
    %16 = arith.mulf %12, %15 : vector<16x128xf32>
    %cst_8 = arith.constant dense<0.000000e+00> : vector<32x128xf32>
    %17 = tpu.matmul %1, %16, %cst_8 {dimension_numbers = #tpu.dot_dimension_numbers<[1], [0], [0], [1], [0, 0, 1, 1], [], []>, precision = #tpu.contract_precision<fp32>} : vector<32x16xf32>, vector<16x128xf32>, vector<32x128xf32> -> vector<32x128xf32>
    %18 = arith.mulf %17, %17 : vector<32x128xf32>
    %cst_9 = arith.constant dense<0.000000e+00> : vector<4x128xf32>
    %19 = tpu.matmul %2, %18, %cst_9 {dimension_numbers = #tpu.dot_dimension_numbers<[1], [0], [0], [1], [0, 0, 1, 1], [], []>, precision = #tpu.contract_precision<fp32>} : vector<4x32xf32>, vector<32x128xf32>, vector<4x128xf32> -> vector<4x128xf32>
    %c0_10 = arith.constant 0 : index
    %c0_11 = arith.constant 0 : index
    %20 = vector.load %arg5[%c0_10, %c0_11] : memref<4x128xf32, #tpu.memory_space<vmem>>, vector<4x128xf32>
    tpu.vector_store %arg5[%c0_10, %c0_11], %19 {strides = array<i32>} : memref<4x128xf32, #tpu.memory_space<vmem>>, vector<4x128xf32>,
    return
  }
  func.func @transform_0(%arg0: i32) -> (i32, i32) {
    %c0_i32 = arith.constant 0 : i32
    %c0_i32_0 = arith.constant 0 : i32
    return %c0_i32, %arg0 : i32, i32
  }
  func.func @transform_1(%arg0: i32) -> (i32, i32) {
    %c0_i32 = arith.constant 0 : i32
    %c0_i32_0 = arith.constant 0 : i32
    %c0_i32_1 = arith.constant 0 : i32
    return %c0_i32, %c0_i32_0 : i32, i32
  }
  func.func @transform_2(%arg0: i32) -> (i32, i32) {
    %c0_i32 = arith.constant 0 : i32
    %c0_i32_0 = arith.constant 0 : i32
    %c0_i32_1 = arith.constant 0 : i32
    return %c0_i32, %c0_i32_0 : i32, i32
  }
  func.func @transform_3(%arg0: i32) -> (i32, i32) {
    %c0_i32 = arith.constant 0 : i32
    %c0_i32_0 = arith.constant 0 : i32
    %c0_i32_1 = arith.constant 0 : i32
    return %c0_i32, %c0_i32_0 : i32, i32
  }
  func.func @transform_4(%arg0: i32) -> (i32, i32) {
    %c0_i32 = arith.constant 0 : i32
    %c0_i32_0 = arith.constant 0 : i32
    return %c0_i32, %arg0 : i32, i32
  }
}

</mosaic_0001>

<llo_original>
// kernel: tpu_custom_call.1
$region0: #{tpu_custom_call.1}
  #allocation0 [shape = 'u32[]', space=smem, size = 0x4, offset = 0x4, fixed_abs, tag = 'smem constant byte address 0x4 - core index']
  #allocation1 [shape = 'u32[144,128]{1,0:T(1,128)}', space=vmem, size = 0x12000, scoped, tag = 'internal scratch']
  %s0 = inlined_call_operand.vmem [shape: f32[4,128], index: 0, kind: input, shape index: {}]
  %s1 = inlined_call_operand.vmem [shape: f32[64,8], index: 1, kind: input, shape index: {}]
  %s2 = inlined_call_operand.vmem [shape: f32[32,16], index: 2, kind: input, shape index: {}]
  %s3 = inlined_call_operand.vmem [shape: f32[4,32], index: 3, kind: input, shape index: {}]
  %s4 = inlined_call_operand.hbm [shape: f32[4,128], index: 4, kind: output, shape index: {}]
  %s5 = sld [smem:[#allocation0]]
  $region26: #{tpu_custom_call.1} parent=0
    _
  %s7 = ssub.s32 1, %s5
  %s8 = scalar_select 0, %s7, %s5
  $region1: #{tpu_custom_call.1} parent=0
    #allocation2 [shape = 'u8[2048]{0}', space=vmem, size = 0x800, scoped, tag = 'output window, operand 0, single buffered']
    #allocation3 [shape = 's32[1]{0}', space=sflag, size = 0x4, scoped, tag = 'scoped memory for tpu_custom_call.1']
    %9 = vsyncpa [#allocation3], 0
    // Predicated region
    $region2: #{tpu_custom_call.1} parent=1 // pred_check
      _
    $region3: #{tpu_custom_call.1} parent=1 // pred_check_branch
      %11 = sbr.rel (0) target = $region5
    $region4: #{tpu_custom_call.1} parent=1 // pred_region
      _
    $region5: #{tpu_custom_call.1} parent=1 // pred_fallthru
      _
    // Predicated region
    $region6: #{tpu_custom_call.1} parent=1 // pred_check
      _
    $region7: #{tpu_custom_call.1} parent=1 // pred_check_branch
      %13 = sbr.rel (0) target = $region9
    $region8: #{tpu_custom_call.1} parent=1 // pred_region
      _
    $region9: #{tpu_custom_call.1} parent=1 // pred_fallthru
      _
    // Predicated region
    $region10: #{tpu_custom_call.1} parent=1 // pred_check
      _
    $region11: #{tpu_custom_call.1} parent=1 // pred_check_branch
      %15 = sbr.rel (0) target = $region13
    $region12: #{tpu_custom_call.1} parent=1 // pred_region
      _
    $region13: #{tpu_custom_call.1} parent=1 // pred_fallthru
      _
    // Predicated region
    $region14: #{tpu_custom_call.1} parent=1 // pred_check
      _
    $region15: #{tpu_custom_call.1} parent=1 // pred_check_branch
      %17 = sbr.rel (0) target = $region17
    $region16: #{tpu_custom_call.1} parent=1 // pred_region
      _
    $region17: #{tpu_custom_call.1} parent=1 // pred_fallthru
      _
    %v18 = vld [vmem:[%s1] sm:$0xff]
    %v19 = vld [vmem:[%s1 + $0x8] sm:$0xff]
    %v20 = vld [vmem:[%s1 + $0x10] sm:$0xff]
    %v21 = vld [vmem:[%s1 + $0x18] sm:$0xff]
    %v22 = vld [vmem:[%s1 + $0x20] sm:$0xff]
    %v23 = vld [vmem:[%s1 + $0x28] sm:$0xff]
    %v24 = vld [vmem:[%s1 + $0x30] sm:$0xff]
    %v25 = vld [vmem:[%s1 + $0x38] sm:$0xff]
    %v26 = vld [vmem:[%s2] sm:$0xff]
    %v27 = vld [vmem:[%s2 + $0x8] sm:$0xff]
    %v28 = vld [vmem:[%s2 + $0x10] sm:$0xff]
    %v29 = vld [vmem:[%s2 + $0x18] sm:$0xff]
    %v30 = vld [vmem:[%s3] sm:$0xf]
    %v31 = vld [vmem:[%s0] sm:$0xf]
    %v32 = vmul.f32 %v31, 0.5
    %v33 = vand.u32 2147483647, %v32
    %vm34 = vcmp.le.f32.partialorder %v33, 0.7853982
    %vm35 = vcmp.lt.s32.totalorder %v32, 0
    %v36 = vand.u32 %v32, 2139095040
    %v37 = vshrl.u32 %v36, 23
    %v38 = vsub.s32 %v37, 127
    %v39 = vand.u32 2147483647, %v32
    %v40 = vand.u32 %v39, 8388607
    %v41 = vor.u32 %v40, 8388608
    %v42 = vsub.s32 0, %v41
    %v43 = vadd.s32 %v38, 1
    %vm44 = vcmp.gt.s32.totalorder %v43, 0
    %v45 = vsel %vm44, %v43, 0
    %v46 = vshrl.u32 %v45, 5
    %v47 = vand.u32 %v45, 31
    %v48 = vsub.s32 32, %v47
    %v49 = vshrl.u32 683565275, %v48
    %v50 = vshll.u32 683565275, %v47
    %v51 = vshrl.u32 2475754826, %v48
    %v52 = vor.u32 %v50, %v51
    %v53 = vshll.u32 2475754826, %v47
    %v54 = vshrl.u32 2131351028, %v48
    %v55 = vor.u32 %v53, %v54
    %v56 = vshll.u32 2131351028, %v47
    %v57 = vshrl.u32 2102212464, %v48
    %v58 = vor.u32 %v56, %v57
    %v59 = vshll.u32 2102212464, %v47
    %v60 = vshrl.u32 920167782, %v48
    %v61 = vor.u32 %v59, %v60
    %v62 = vshll.u32 920167782, %v47
    %v63 = vshrl.u32 1326507024, %v48
    %v64 = vor.u32 %v62, %v63
    %vm65 = vcmp.lt.s32.totalorder %v46, 1
    %vm66 = vcmp.lt.s32.totalorder %v46, 2
    %vm67 = vcmp.lt.s32.totalorder %v46, 3
    %vm68 = vcmp.lt.s32.totalorder %v46, 4
    %v69 = vsel %vm65, %v49, %v52
    %v70 = vsel %vm68, %v58, 2102212464
    %v71 = vsel %vm67, %v55, %v70
    %v72 = vsel %vm66, %v69, %v71
    %v73 = vsel %vm65, %v52, %v55
    %v74 = vsel %vm68, %v61, 920167782
    %v75 = vsel %vm67, %v58, %v74
    %v76 = vsel %vm66, %v73, %v75
    %v77 = vsel %vm65, %v55, %v58
    %v78 = vsel %vm68, %v64, 1326507024
    %v79 = vsel %vm67, %v61, %v78
    %v80 = vsel %vm66, %v77, %v79
    %v81 = vshll.u32 %v41, 8
    %v82 = vmul.u32.u64.compose %v81, %v80
    %v83 = vextract.low.u32 %v82
    %v84 = vextract.high.u32 %v82
    %v85 = vmul.u32.u64.compose %v81, %v76
    %v86 = vextract.low.u32 %v85
    %v87 = vextract.high.u32 %v85
    %v88 = vmul.u32 %v81, %v72
    %v89 = vadd.s32 %v84, %v86
    %vm90 = vc.u32 %v84, %v86
    %v91 = vadd.s32 %v87, 1
    %v92 = vsel %vm90, %v91, %v87
    %v93 = vadd.s32 %v88, %v92
    %v94 = vadd.s32 %v93, 536870912
    %v95 = vshrl.u32 %v94, 30
    %v96 = vshll.u32 %v95, 30
    %v97 = vsub.s32 %v93, %v96
    %vm98 = vcmp.lt.s32.totalorder %v97, 0
    %v99 = vsub.s32 0, %v97
    %v100 = vsel %vm98, %v99, %v97
    %v101 = vclz %v100
    %v102 = vsub.s32 %v101, 2
    %vm103 = vcmp.gt.s32.totalorder 0, %v102
    %v104 = vsel %vm103, 0, %v102
    %v105 = vsub.s32 32, %v104
    %v106 = vshll.u32 %v97, %v104
    %v107 = vshrl.u32 %v89, %v105
    %v108 = vor.u32 %v106, %v107
    %v109 = vsub.s32 4294967266, %v104
    %v110 = vadd.s32 %v109, 127
    %v111 = vshll.u32 %v110, 23
    %v112 = vor.u32 4788187, %v111
    %v113 = vand.u32 2147483647, %v112
    %v115 = vcvt.s32.f32 %v108
    %v116 = vmul.f32 %v115, %v113
    %v117 = vxor.u32 %v116, 2147483648
    %v118 = vsel %vm35, %v117, %v116
    %v119 = vsub.s32 4, %v95
    %v120 = vsel %vm35, %v119, %v95
    %v121 = vsel %vm34, %v32, %v118
    %v122 = vsel %vm34, 0, %v120
    %v123 = vcosq.f32.pop %v121
    %v124 = vsinq.f32.pop %v121
    %vm125 = vweird.f32 %v32
    %v126 = vand.u32 %v122, 3
    %vm127 = vcmp.lt.s32.totalorder %v126, 2
    %vm128 = vcmp.eq.s32.totalorder %v126, 0
    %v129 = vxor.u32 %v124, 2147483648
    %v130 = vsel %vm128, %v123, %v129
    %vm131 = vcmp.eq.s32.totalorder %v126, 2
    %v132 = vxor.u32 %v123, 2147483648
    %v133 = vsel %vm131, %v132, %v124
    %v134 = vsel %vm127, %v130, %v133
    %v135 = vsel %vm125, nan, %v134
    %v136 = vand.u32 2147483647, %v32
    %vm137 = vcmp.le.f32.partialorder %v136, 0.7853982
    %vm138 = vcmp.lt.s32.totalorder %v32, 0
    %v139 = vand.u32 %v32, 2139095040
    %v140 = vshrl.u32 %v139, 23
    %v141 = vsub.s32 %v140, 127
    %v142 = vand.u32 2147483647, %v32
    %v143 = vand.u32 %v142, 8388607
    %v144 = vor.u32 %v143, 8388608
    %v145 = vsub.s32 0, %v144
    %v146 = vadd.s32 %v141, 1
    %vm147 = vcmp.gt.s32.totalorder %v146, 0
    %v148 = vsel %vm147, %v146, 0
    %v149 = vshrl.u32 %v148, 5
    %v150 = vand.u32 %v148, 31
    %v151 = vsub.s32 32, %v150
    %v152 = vshrl.u32 683565275, %v151
    %v153 = vshll.u32 683565275, %v150
    %v154 = vshrl.u32 2475754826, %v151
    %v155 = vor.u32 %v153, %v154
    %v156 = vshll.u32 2475754826, %v150
    %v157 = vshrl.u32 2131351028, %v151
    %v158 = vor.u32 %v156, %v157
    %v159 = vshll.u32 2131351028, %v150
    %v160 = vshrl.u32 2102212464, %v151
    %v161 = vor.u32 %v159, %v160
    %v162 = vshll.u32 2102212464, %v150
    %v163 = vshrl.u32 920167782, %v151
    %v164 = vor.u32 %v162, %v163
    %v165 = vshll.u32 920167782, %v150
    %v166 = vshrl.u32 1326507024, %v151
    %v167 = vor.u32 %v165, %v166
    %vm168 = vcmp.lt.s32.totalorder %v149, 1
    %vm169 = vcmp.lt.s32.totalorder %v149, 2
    %vm170 = vcmp.lt.s32.totalorder %v149, 3
    %vm171 = vcmp.lt.s32.totalorder %v149, 4
    %v172 = vsel %vm168, %v152, %v155
    %v173 = vsel %vm171, %v161, 2102212464
    %v174 = vsel %vm170, %v158, %v173
    %v175 = vsel %vm169, %v172, %v174
    %v176 = vsel %vm168, %v155, %v158
    %v177 = vsel %vm171, %v164, 920167782
    %v178 = vsel %vm170, %v161, %v177
    %v179 = vsel %vm169, %v176, %v178
    %v180 = vsel %vm168, %v158, %v161
    %v181 = vsel %vm171, %v167, 1326507024
    %v182 = vsel %vm170, %v164, %v181
    %v183 = vsel %vm169, %v180, %v182
    %v184 = vshll.u32 %v144, 8
    %v185 = vmul.u32.u64.compose %v184, %v183
    %v186 = vextract.low.u32 %v185
    %v187 = vextract.high.u32 %v185
    %v188 = vmul.u32.u64.compose %v184, %v179
    %v189 = vextract.low.u32 %v188
    %v190 = vextract.high.u32 %v188
    %v191 = vmul.u32 %v184, %v175
    %v192 = vadd.s32 %v187, %v189
    %vm193 = vc.u32 %v187, %v189
    %v194 = vadd.s32 %v190, 1
    %v195 = vsel %vm193, %v194, %v190
    %v196 = vadd.s32 %v191, %v195
    %v197 = vadd.s32 %v196, 536870912
    %v198 = vshrl.u32 %v197, 30
    %v199 = vshll.u32 %v198, 30
    %v200 = vsub.s32 %v196, %v199
    %vm201 = vcmp.lt.s32.totalorder %v200, 0
    %v202 = vsub.s32 0, %v200
    %v203 = vsel %vm201, %v202, %v200
    %v204 = vclz %v203
    %v205 = vsub.s32 %v204, 2
    %vm206 = vcmp.gt.s32.totalorder 0, %v205
    %v207 = vsel %vm206, 0, %v205
    %v208 = vsub.s32 32, %v207
    %v209 = vshll.u32 %v200, %v207
    %v210 = vshrl.u32 %v192, %v208
    %v211 = vor.u32 %v209, %v210
    %v212 = vsub.s32 4294967266, %v207
    %v213 = vadd.s32 %v212, 127
    %v214 = vshll.u32 %v213, 23
    %v215 = vor.u32 4788187, %v214
    %v216 = vand.u32 2147483647, %v215
    %v218 = vcvt.s32.f32 %v211
    %v219 = vmul.f32 %v218, %v216
    %v220 = vxor.u32 %v219, 2147483648
    %v221 = vsel %vm138, %v220, %v219
    %v222 = vsub.s32 4, %v198
    %v223 = vsel %vm138, %v222, %v198
    %v224 = vsel %vm137, %v32, %v221
    %v225 = vsel %vm137, 0, %v223
    %v226 = vcosq.f32.pop %v224
    %v227 = vsinq.f32.pop %v224
    %vm228 = vweird.f32 %v32
    %v229 = vadd.s32 %v225, 3
    %v230 = vand.u32 %v229, 3
    %vm231 = vcmp.lt.s32.totalorder %v230, 2
    %vm232 = vcmp.eq.s32.totalorder %v230, 0
    %v233 = vxor.u32 %v227, 2147483648
    %v234 = vsel %vm232, %v226, %v233
    %vm235 = vcmp.eq.s32.totalorder %v230, 2
    %v236 = vxor.u32 %v226, 2147483648
    %v237 = vsel %vm235, %v236, %v227
    %v238 = vsel %vm231, %v234, %v237
    %v239 = vsel %vm228, nan, %v238
    %v241 = vrot.slane %v239, 4
    %vm243 = vcmask 1043456
    %v244 = vsel %vm243, %v135, %v241
    %vm245 = vcmask 64512
    %v247 = vsel %vm245, %v18, 0
    %v250 = vsel %vm245, %v19, 0
    %v253 = vsel %vm245, %v20, 0
    %v256 = vsel %vm245, %v21, 0
    %v259 = vsel %vm245, %v22, 0
    %v262 = vsel %vm245, %v23, 0
    %v265 = vsel %vm245, %v24, 0
    %v268 = vsel %vm245, %v25, 0
    %270 = vmatprep.subr.mxu0 0.0
    %v271 = vand.u32 %v244, 4294901760
    %272 = vmatpush1.msra.mxu0 %v271
    %273 = vmatprep.subr.mxu0 0.0
    %274 = vmatpush1.msra.mxu0 0.0
    %275 = vmatprep.subr.mxu0 0.0
    %276 = vmatpush1.msra.mxu0 0.0
    %277 = vmatprep.subr.mxu0 0.0
    %278 = vmatpush1.msra.mxu0 0.0
    %279 = vmatprep.subr.mxu0 0.0
    %280 = vmatpush1.msra.mxu0 0.0
    %281 = vmatprep.subr.mxu0 0.0
    %282 = vmatpush1.msra.mxu0 0.0
    %283 = vmatprep.subr.mxu0 0.0
    %284 = vmatpush1.msra.mxu0 0.0
    %285 = vmatprep.subr.mxu0 0.0
    %286 = vmatpush1.msra.mxu0 0.0
    %287 = vmatprep.subr.mxu0 0.0
    %288 = vmatpush1.msra.mxu0 0.0
    %289 = vmatprep.subr.mxu0 0.0
    %290 = vmatpush1.msra.mxu0 0.0
    %291 = vmatprep.subr.mxu0 0.0
    %292 = vmatpush1.msra.mxu0 0.0
    %293 = vmatprep.subr.mxu0 0.0
    %294 = vmatpush1.msra.mxu0 0.0
    %295 = vmatprep.subr.mxu0 0.0
    %296 = vmatpush1.msra.mxu0 0.0
    %297 = vmatprep.subr.mxu0 0.0
    %298 = vmatpush1.msra.mxu0 0.0
    %299 = vmatprep.subr.mxu0 0.0
    %300 = vmatpush1.msra.mxu0 0.0
    %301 = vmatprep.subr.mxu0 0.0
    %302 = vmatpush1.msra.mxu0 0.0
    %303 = vmatprep.subr.mxu0 0.0
    %304 = vmatpush1.msra.mxu0 0.0
    %305 = vmatprep.subr.mxu0 0.0
    %306 = vmatpush1.msra.mxu0 0.0
    %307 = vmatprep.subr.mxu0 0.0
    %308 = vmatpush1.msra.mxu0 0.0
    %309 = vmatprep.subr.mxu0 0.0
    %310 = vmatpush1.msra.mxu0 0.0
    %311 = vmatprep.subr.mxu0 0.0
    %312 = vmatpush1.msra.mxu0 0.0
    %313 = vmatprep.subr.mxu0 0.0
    %314 = vmatpush1.msra.mxu0 0.0
    %315 = vmatprep.subr.mxu0 0.0
    %316 = vmatpush1.msra.mxu0 0.0
    %317 = vmatprep.subr.mxu0 0.0
    %318 = vmatpush1.msra.mxu0 0.0
    %319 = vmatprep.subr.mxu0 0.0
    %320 = vmatpush1.msra.mxu0 0.0
    %321 = vmatprep.subr.mxu0 0.0
    %322 = vmatpush1.msra.mxu0 0.0
    %323 = vmatprep.subr.mxu0 0.0
    %324 = vmatpush1.msra.mxu0 0.0
    %325 = vmatprep.subr.mxu0 0.0
    %326 = vmatpush1.msra.mxu0 0.0
    %327 = vmatprep.subr.mxu0 0.0
    %328 = vmatpush1.msra.mxu0 0.0
    %329 = vmatprep.subr.mxu0 0.0
    %330 = vmatpush1.msra.mxu0 0.0
    %331 = vmatprep.subr.mxu0 0.0
    %332 = vmatpush1.msra.mxu0 0.0
    %333 = vmatprep.subr.mxu0 0.0
    %334 = vmatpush1.msra.mxu0 0.0
    %335 = vmatprep.mubr.f32.mxu0 0.0
    %v336 = vand.u32 %v247, 4294901760
    %v337 = vsub.f32 %v247, %v336
    %v338 = vand.u32 %v337, 4294901760
    %v339 = vsub.f32 %v337, %v338
    %v340 = vand.u32 %v339, 4294901760
    %341 = vmatmul.mubr.f32.gmra.mrb[0].mxu0 %v340
    %v342 = vpop.f32.mrb[0].mxu0
    %v343 = vadd.f32 0.0, %v342
    %v344 = vpop.f32.mrb[0].mxu0
    %345 = vmatprep.mubr.f32.mxu0 0.0
    %v346 = vand.u32 %v250, 4294901760
    %v347 = vsub.f32 %v250, %v346
    %v348 = vand.u32 %v347, 4294901760
    %v349 = vsub.f32 %v347, %v348
    %v350 = vand.u32 %v349, 4294901760
    %351 = vmatmul.mubr.f32.gmra.mrb[0].mxu0 %v350
    %v352 = vpop.f32.mrb[0].mxu0
    %v353 = vadd.f32 0.0, %v352
    %v354 = vpop.f32.mrb[0].mxu0
    %355 = vmatprep.mubr.f32.mxu0 0.0
    %v356 = vand.u32 %v253, 4294901760
    %v357 = vsub.f32 %v253, %v356
    %v358 = vand.u32 %v357, 4294901760
    %v359 = vsub.f32 %v357, %v358
    %v360 = vand.u32 %v359, 4294901760
    %361 = vmatmul.mubr.f32.gmra.mrb[0].mxu0 %v360
    %v362 = vpop.f32.mrb[0].mxu0
    %v363 = vadd.f32 0.0, %v362
    %v364 = vpop.f32.mrb[0].mxu0
    %365 = vmatprep.mubr.f32.mxu0 0.0
    %v366 = vand.u32 %v256, 4294901760
    %v367 = vsub.f32 %v256, %v366
    %v368 = vand.u32 %v367, 4294901760
    %v369 = vsub.f32 %v367, %v368
    %v370 = vand.u32 %v369, 4294901760
    %371 = vmatmul.mubr.f32.gmra.mrb[0].mxu0 %v370
    %v372 = vpop.f32.mrb[0].mxu0
    %v373 = vadd.f32 0.0, %v372
    %v374 = vpop.f32.mrb[0].mxu0
    %375 = vmatprep.mubr.f32.mxu0 0.0
    %v376 = vand.u32 %v259, 4294901760
    %v377 = vsub.f32 %v259, %v376
    %v378 = vand.u32 %v377, 4294901760
    %v379 = vsub.f32 %v377, %v378
    %v380 = vand.u32 %v379, 4294901760
    %381 = vmatmul.mubr.f32.gmra.mrb[0].mxu0 %v380
    %v382 = vpop.f32.mrb[0].mxu0
    %v383 = vadd.f32 0.0, %v382
    %v384 = vpop.f32.mrb[0].mxu0
    %385 = vmatprep.mubr.f32.mxu0 0.0
    %v386 = vand.u32 %v262, 4294901760
    %v387 = vsub.f32 %v262, %v386
    %v388 = vand.u32 %v387, 4294901760
    %v389 = vsub.f32 %v387, %v388
    %v390 = vand.u32 %v389, 4294901760
    %391 = vmatmul.mubr.f32.gmra.mrb[0].mxu0 %v390
    %v392 = vpop.f32.mrb[0].mxu0
    %v393 = vadd.f32 0.0, %v392
    %v394 = vpop.f32.mrb[0].mxu0
    %395 = vmatprep.mubr.f32.mxu0 0.0
    %v396 = vand.u32 %v265, 4294901760
    %v397 = vsub.f32 %v265, %v396
    %v398 = vand.u32 %v397, 4294901760
    %v399 = vsub.f32 %v397, %v398
    %v400 = vand.u32 %v399, 4294901760
    %401 = vmatmul.mubr.f32.gmra.mrb[0].mxu0 %v400
    %v402 = vpop.f32.mrb[0].mxu0
    %v403 = vadd.f32 0.0, %v402
    %v404 = vpop.f32.mrb[0].mxu0
    %405 = vmatprep.mubr.f32.mxu0 0.0
    %v406 = vand.u32 %v268, 4294901760
    %v407 = vsub.f32 %v268, %v406
    %v408 = vand.u32 %v407, 4294901760
    %v409 = vsub.f32 %v407, %v408
    %v410 = vand.u32 %v409, 4294901760
    %411 = vmatmul.mubr.f32.gmra.mrb[0].mxu0 %v410
    %v412 = vpop.f32.mrb[0].mxu0
    %v413 = vadd.f32 0.0, %v412
    %v414 = vpop.f32.mrb[0].mxu0
    %415 = vdwg.mxu0
    %416 = vmatprep.subr.mxu0 0.0
    %v417 = vand.u32 %v244, 4294901760
    %v418 = vsub.f32 %v244, %v417
    %v419 = vand.u32 %v418, 4294901760
    %v420 = vsub.f32 %v418, %v419
    %v421 = vand.u32 %v420, 4294901760
    %422 = vmatpush1.msra.mxu0 %v421
    %423 = vmatprep.subr.mxu0 0.0
    %424 = vmatpush1.msra.mxu0 0.0
    %425 = vmatprep.subr.mxu0 0.0
    %426 = vmatpush1.msra.mxu0 0.0
    %427 = vmatprep.subr.mxu0 0.0
    %428 = vmatpush1.msra.mxu0 0.0
    %429 = vmatprep.subr.mxu0 0.0
    %430 = vmatpush1.msra.mxu0 0.0
    %431 = vmatprep.subr.mxu0 0.0
    %432 = vmatpush1.msra.mxu0 0.0
    %433 = vmatprep.subr.mxu0 0.0
    %434 = vmatpush1.msra.mxu0 0.0
    %435 = vmatprep.subr.mxu0 0.0
    %436 = vmatpush1.msra.mxu0 0.0
    %437 = vmatprep.subr.mxu0 0.0
    %438 = vmatpush1.msra.mxu0 0.0
    %439 = vmatprep.subr.mxu0 0.0
    %440 = vmatpush1.msra.mxu0 0.0
    %441 = vmatprep.subr.mxu0 0.0
    %442 = vmatpush1.msra.mxu0 0.0
    %443 = vmatprep.subr.mxu0 0.0
    %444 = vmatpush1.msra.mxu0 0.0
    %445 = vmatprep.subr.mxu0 0.0
    %446 = vmatpush1.msra.mxu0 0.0
    %447 = vmatprep.subr.mxu0 0.0
    %448 = vmatpush1.msra.mxu0 0.0
    %449 = vmatprep.subr.mxu0 0.0
    %450 = vmatpush1.msra.mxu0 0.0
    %451 = vmatprep.subr.mxu0 0.0
    %452 = vmatpush1.msra.mxu0 0.0
    %453 = vmatprep.subr.mxu0 0.0
    %454 = vmatpush1.msra.mxu0 0.0
    %455 = vmatprep.subr.mxu0 0.0
    %456 = vmatpush1.msra.mxu0 0.0
    %457 = vmatprep.subr.mxu0 0.0
    %458 = vmatpush1.msra.mxu0 0.0
    %459 = vmatprep.subr.mxu0 0.0
    %460 = vmatpush1.msra.mxu0 0.0
    %461 = vmatprep.subr.mxu0 0.0
    %462 = vmatpush1.msra.mxu0 0.0
    %463 = vmatprep.subr.mxu0 0.0
    %464 = vmatpush1.msra.mxu0 0.0
    %465 = vmatprep.subr.mxu0 0.0
    %466 = vmatpush1.msra.mxu0 0.0
    %467 = vmatprep.subr.mxu0 0.0
    %468 = vmatpush1.msra.mxu0 0.0
    %469 = vmatprep.subr.mxu0 0.0
    %470 = vmatpush1.msra.mxu0 0.0
    %471 = vmatprep.subr.mxu0 0.0
    %472 = vmatpush1.msra.mxu0 0.0
    %473 = vmatprep.subr.mxu0 0.0
    %474 = vmatpush1.msra.mxu0 0.0
    %475 = vmatprep.subr.mxu0 0.0
    %476 = vmatpush1.msra.mxu0 0.0
    %477 = vmatprep.subr.mxu0 0.0
    %478 = vmatpush1.msra.mxu0 0.0
    %479 = vmatprep.subr.mxu0 0.0
    %480 = vmatpush1.msra.mxu0 0.0
    %481 = vmatprep.subr.mxu0 0.0
    %482 = vmatpush1.msra.mxu0 0.0
    %483 = vmatprep.subr.mxu0 0.0
    %484 = vmatpush1.msra.mxu0 0.0
    %485 = vmatprep.mubr.f32.mxu0 0.0
    %v486 = vand.u32 %v247, 4294901760
    %487 = vmatmul.mubr.f32.gmra.mrb[0].mxu0 %v486
    %v488 = vpop.f32.mrb[0].mxu0
    %v489 = vadd.f32 %v343, %v488
    %v490 = vpop.f32.mrb[0].mxu0
    %491 = vmatprep.mubr.f32.mxu0 0.0
    %v492 = vand.u32 %v250, 4294901760
    %493 = vmatmul.mubr.f32.gmra.mrb[0].mxu0 %v492
    %v494 = vpop.f32.mrb[0].mxu0
    %v495 = vadd.f32 %v353, %v494
    %v496 = vpop.f32.mrb[0].mxu0
    %497 = vmatprep.mubr.f32.mxu0 0.0
    %v498 = vand.u32 %v253, 4294901760
    %499 = vmatmul.mubr.f32.gmra.mrb[0].mxu0 %v498
    %v500 = vpop.f32.mrb[0].mxu0
    %v501 = vadd.f32 %v363, %v500
    %v502 = vpop.f32.mrb[0].mxu0
    %503 = vmatprep.mubr.f32.mxu0 0.0
    %v504 = vand.u32 %v256, 4294901760
    %505 = vmatmul.mubr.f32.gmra.mrb[0].mxu0 %v504
    %v506 = vpop.f32.mrb[0].mxu0
    %v507 = vadd.f32 %v373, %v506
    %v508 = vpop.f32.mrb[0].mxu0
    %509 = vmatprep.mubr.f32.mxu0 0.0
    %v510 = vand.u32 %v259, 4294901760
    %511 = vmatmul.mubr.f32.gmra.mrb[0].mxu0 %v510
    %v512 = vpop.f32.mrb[0].mxu0
    %v513 = vadd.f32 %v383, %v512
    %v514 = vpop.f32.mrb[0].mxu0
    %515 = vmatprep.mubr.f32.mxu0 0.0
    %v516 = vand.u32 %v262, 4294901760
    %517 = vmatmul.mubr.f32.gmra.mrb[0].mxu0 %v516
    %v518 = vpop.f32.mrb[0].mxu0
    %v519 = vadd.f32 %v393, %v518
    %v520 = vpop.f32.mrb[0].mxu0
    %521 = vmatprep.mubr.f32.mxu0 0.0
    %v522 = vand.u32 %v265, 4294901760
    %523 = vmatmul.mubr.f32.gmra.mrb[0].mxu0 %v522
    %v524 = vpop.f32.mrb[0].mxu0
    %v525 = vadd.f32 %v403, %v524
    %v526 = vpop.f32.mrb[0].mxu0
    %527 = vmatprep.mubr.f32.mxu0 0.0
    %v528 = vand.u32 %v268, 4294901760
    %529 = vmatmul.mubr.f32.gmra.mrb[0].mxu0 %v528
    %v530 = vpop.f32.mrb[0].mxu0
    %v531 = vadd.f32 %v413, %v530
    %v532 = vpop.f32.mrb[0].mxu0
    %533 = vdwg.mxu0
    %534 = vmatprep.subr.mxu0 0.0
    %v535 = vand.u32 %v244, 4294901760
    %v536 = vsub.f32 %v244, %v535
    %537 = vmatpush1.msra.mxu0 %v536
    %538 = vmatprep.subr.mxu0 0.0
    %539 = vmatpush1.msra.mxu0 0.0
    %540 = vmatprep.subr.mxu0 0.0
    %541 = vmatpush1.msra.mxu0 0.0
    %542 = vmatprep.subr.mxu0 0.0
    %543 = vmatpush1.msra.mxu0 0.0
    %544 = vmatprep.subr.mxu0 0.0
    %545 = vmatpush1.msra.mxu0 0.0
    %546 = vmatprep.subr.mxu0 0.0
    %547 = vmatpush1.msra.mxu0 0.0
    %548 = vmatprep.subr.mxu0 0.0
    %549 = vmatpush1.msra.mxu0 0.0
    %550 = vmatprep.subr.mxu0 0.0
    %551 = vmatpush1.msra.mxu0 0.0
    %552 = vmatprep.subr.mxu0 0.0
    %553 = vmatpush1.msra.mxu0 0.0
    %554 = vmatprep.subr.mxu0 0.0
    %555 = vmatpush1.msra.mxu0 0.0
    %556 = vmatprep.subr.mxu0 0.0
    %557 = vmatpush1.msra.mxu0 0.0
    %558 = vmatprep.subr.mxu0 0.0
    %559 = vmatpush1.msra.mxu0 0.0
    %560 = vmatprep.subr.mxu0 0.0
    %561 = vmatpush1.msra.mxu0 0.0
    %562 = vmatprep.subr.mxu0 0.0
    %563 = vmatpush1.msra.mxu0 0.0
    %564 = vmatprep.subr.mxu0 0.0
    %565 = vmatpush1.msra.mxu0 0.0
    %566 = vmatprep.subr.mxu0 0.0
    %567 = vmatpush1.msra.mxu0 0.0
    %568 = vmatprep.subr.mxu0 0.0
    %569 = vmatpush1.msra.mxu0 0.0
    %570 = vmatprep.subr.mxu0 0.0
    %571 = vmatpush1.msra.mxu0 0.0
    %572 = vmatprep.subr.mxu0 0.0
    %573 = vmatpush1.msra.mxu0 0.0
    %574 = vmatprep.subr.mxu0 0.0
    %575 = vmatpush1.msra.mxu0 0.0
    %576 = vmatprep.subr.mxu0 0.0
    %577 = vmatpush1.msra.mxu0 0.0
    %578 = vmatprep.subr.mxu0 0.0
    %579 = vmatpush1.msra.mxu0 0.0
    %580 = vmatprep.subr.mxu0 0.0
    %581 = vmatpush1.msra.mxu0 0.0
    %582 = vmatprep.subr.mxu0 0.0
    %583 = vmatpush1.msra.mxu0 0.0
    %584 = vmatprep.subr.mxu0 0.0
    %585 = vmatpush1.msra.mxu0 0.0
    %586 = vmatprep.subr.mxu0 0.0
    %587 = vmatpush1.msra.mxu0 0.0
    %588 = vmatprep.subr.mxu0 0.0
    %589 = vmatpush1.msra.mxu0 0.0
    %590 = vmatprep.subr.mxu0 0.0
    %591 = vmatpush1.msra.mxu0 0.0
    %592 = vmatprep.subr.mxu0 0.0
    %593 = vmatpush1.msra.mxu0 0.0
    %594 = vmatprep.subr.mxu0 0.0
    %595 = vmatpush1.msra.mxu0 0.0
    %596 = vmatprep.subr.mxu0 0.0
    %597 = vmatpush1.msra.mxu0 0.0
    %598 = vmatprep.subr.mxu0 0.0
    %599 = vmatpush1.msra.mxu0 0.0
    %600 = vmatprep.mubr.f32.mxu0 0.0
    %v601 = vand.u32 %v247, 4294901760
    %v602 = vsub.f32 %v247, %v601
    %603 = vmatmul.mubr.f32.gmra.mrb[0].mxu0 %v602
    %v604 = vpop.f32.mrb[0].mxu0
    %v605 = vadd.f32 %v489, %v604
    %v606 = vpop.f32.mrb[0].mxu0
    %607 = vmatprep.mubr.f32.mxu0 0.0
    %v608 = vand.u32 %v250, 4294901760
    %v609 = vsub.f32 %v250, %v608
    %610 = vmatmul.mubr.f32.gmra.mrb[0].mxu0 %v609
    %v611 = vpop.f32.mrb[0].mxu0
    %v612 = vadd.f32 %v495, %v611
    %v613 = vpop.f32.mrb[0].mxu0
    %614 = vmatprep.mubr.f32.mxu0 0.0
    %v615 = vand.u32 %v253, 4294901760
    %v616 = vsub.f32 %v253, %v615
    %617 = vmatmul.mubr.f32.gmra.mrb[0].mxu0 %v616
    %v618 = vpop.f32.mrb[0].mxu0
    %v619 = vadd.f32 %v501, %v618
    %v620 = vpop.f32.mrb[0].mxu0
    %621 = vmatprep.mubr.f32.mxu0 0.0
    %v622 = vand.u32 %v256, 4294901760
    %v623 = vsub.f32 %v256, %v622
    %624 = vmatmul.mubr.f32.gmra.mrb[0].mxu0 %v623
    %v625 = vpop.f32.mrb[0].mxu0
    %v626 = vadd.f32 %v507, %v625
    %v627 = vpop.f32.mrb[0].mxu0
    %628 = vmatprep.mubr.f32.mxu0 0.0
    %v629 = vand.u32 %v259, 4294901760
    %v630 = vsub.f32 %v259, %v629
    %631 = vmatmul.mubr.f32.gmra.mrb[0].mxu0 %v630
    %v632 = vpop.f32.mrb[0].mxu0
    %v633 = vadd.f32 %v513, %v632
    %v634 = vpop.f32.mrb[0].mxu0
    %635 = vmatprep.mubr.f32.mxu0 0.0
    %v636 = vand.u32 %v262, 4294901760
    %v637 = vsub.f32 %v262, %v636
    %638 = vmatmul.mubr.f32.gmra.mrb[0].mxu0 %v637
    %v639 = vpop.f32.mrb[0].mxu0
    %v640 = vadd.f32 %v519, %v639
    %v641 = vpop.f32.mrb[0].mxu0
    %642 = vmatprep.mubr.f32.mxu0 0.0
    %v643 = vand.u32 %v265, 4294901760
    %v644 = vsub.f32 %v265, %v643
    %645 = vmatmul.mubr.f32.gmra.mrb[0].mxu0 %v644
    %v646 = vpop.f32.mrb[0].mxu0
    %v647 = vadd.f32 %v525, %v646
    %v648 = vpop.f32.mrb[0].mxu0
    %649 = vmatprep.mubr.f32.mxu0 0.0
    %v650 = vand.u32 %v268, 4294901760
    %v651 = vsub.f32 %v268, %v650
    %652 = vmatmul.mubr.f32.gmra.mrb[0].mxu0 %v651
    %v653 = vpop.f32.mrb[0].mxu0
    %v654 = vadd.f32 %v531, %v653
    %v655 = vpop.f32.mrb[0].mxu0
    %656 = vdwg.mxu0
    %657 = vmatprep.subr.mxu0 0.0
    %v658 = vand.u32 %v244, 4294901760
    %659 = vmatpush1.msra.mxu0 %v658
    %660 = vmatprep.subr.mxu0 0.0
    %661 = vmatpush1.msra.mxu0 0.0
    %662 = vmatprep.subr.mxu0 0.0
    %663 = vmatpush1.msra.mxu0 0.0
    %664 = vmatprep.subr.mxu0 0.0
    %665 = vmatpush1.msra.mxu0 0.0
    %666 = vmatprep.subr.mxu0 0.0
    %667 = vmatpush1.msra.mxu0 0.0
    %668 = vmatprep.subr.mxu0 0.0
    %669 = vmatpush1.msra.mxu0 0.0
    %670 = vmatprep.subr.mxu0 0.0
    %671 = vmatpush1.msra.mxu0 0.0
    %672 = vmatprep.subr.mxu0 0.0
    %673 = vmatpush1.msra.mxu0 0.0
    %674 = vmatprep.subr.mxu0 0.0
    %675 = vmatpush1.msra.mxu0 0.0
    %676 = vmatprep.subr.mxu0 0.0
    %677 = vmatpush1.msra.mxu0 0.0
    %678 = vmatprep.subr.mxu0 0.0
    %679 = vmatpush1.msra.mxu0 0.0
    %680 = vmatprep.subr.mxu0 0.0
    %681 = vmatpush1.msra.mxu0 0.0
    %682 = vmatprep.subr.mxu0 0.0
    %683 = vmatpush1.msra.mxu0 0.0
    %684 = vmatprep.subr.mxu0 0.0
    %685 = vmatpush1.msra.mxu0 0.0
    %686 = vmatprep.subr.mxu0 0.0
    %687 = vmatpush1.msra.mxu0 0.0
    %688 = vmatprep.subr.mxu0 0.0
    %689 = vmatpush1.msra.mxu0 0.0
    %690 = vmatprep.subr.mxu0 0.0
    %691 = vmatpush1.msra.mxu0 0.0
    %692 = vmatprep.subr.mxu0 0.0
    %693 = vmatpush1.msra.mxu0 0.0
    %694 = vmatprep.subr.mxu0 0.0
    %695 = vmatpush1.msra.mxu0 0.0
    %696 = vmatprep.subr.mxu0 0.0
    %697 = vmatpush1.msra.mxu0 0.0
    %698 = vmatprep.subr.mxu0 0.0
    %699 = vmatpush1.msra.mxu0 0.0
    %700 = vmatprep.subr.mxu0 0.0
    %701 = vmatpush1.msra.mxu0 0.0
    %702 = vmatprep.subr.mxu0 0.0
    %703 = vmatpush1.msra.mxu0 0.0
    %704 = vmatprep.subr.mxu0 0.0
    %705 = vmatpush1.msra.mxu0 0.0
    %706 = vmatprep.subr.mxu0 0.0
    %707 = vmatpush1.msra.mxu0 0.0
    %708 = vmatprep.subr.mxu0 0.0
    %709 = vmatpush1.msra.mxu0 0.0
    %710 = vmatprep.subr.mxu0 0.0
    %711 = vmatpush1.msra.mxu0 0.0
    %712 = vmatprep.subr.mxu0 0.0
    %713 = vmatpush1.msra.mxu0 0.0
    %714 = vmatprep.subr.mxu0 0.0
    %715 = vmatpush1.msra.mxu0 0.0
    %716 = vmatprep.subr.mxu0 0.0
    %717 = vmatpush1.msra.mxu0 0.0
    %718 = vmatprep.subr.mxu0 0.0
    %719 = vmatpush1.msra.mxu0 0.0
    %720 = vmatprep.subr.mxu0 0.0
    %721 = vmatpush1.msra.mxu0 0.0
    %722 = vmatprep.mubr.f32.mxu0 0.0
    %v723 = vand.u32 %v247, 4294901760
    %v724 = vsub.f32 %v247, %v723
    %v725 = vand.u32 %v724, 4294901760
    %726 = vmatmul.mubr.f32.gmra.mrb[0].mxu0 %v725
    %v727 = vpop.f32.mrb[0].mxu0
    %v728 = vadd.f32 %v605, %v727
    %v729 = vpop.f32.mrb[0].mxu0
    %730 = vmatprep.mubr.f32.mxu0 0.0
    %v731 = vand.u32 %v250, 4294901760
    %v732 = vsub.f32 %v250, %v731
    %v733 = vand.u32 %v732, 4294901760
    %734 = vmatmul.mubr.f32.gmra.mrb[0].mxu0 %v733
    %v735 = vpop.f32.mrb[0].mxu0
    %v736 = vadd.f32 %v612, %v735
    %v737 = vpop.f32.mrb[0].mxu0
    %738 = vmatprep.mubr.f32.mxu0 0.0
    %v739 = vand.u32 %v253, 4294901760
    %v740 = vsub.f32 %v253, %v739
    %v741 = vand.u32 %v740, 4294901760
    %742 = vmatmul.mubr.f32.gmra.mrb[0].mxu0 %v741
    %v743 = vpop.f32.mrb[0].mxu0
    %v744 = vadd.f32 %v619, %v743
    %v745 = vpop.f32.mrb[0].mxu0
    %746 = vmatprep.mubr.f32.mxu0 0.0
    %v747 = vand.u32 %v256, 4294901760
    %v748 = vsub.f32 %v256, %v747
    %v749 = vand.u32 %v748, 4294901760
    %750 = vmatmul.mubr.f32.gmra.mrb[0].mxu0 %v749
    %v751 = vpop.f32.mrb[0].mxu0
    %v752 = vadd.f32 %v626, %v751
    %v753 = vpop.f32.mrb[0].mxu0
    %754 = vmatprep.mubr.f32.mxu0 0.0
    %v755 = vand.u32 %v259, 4294901760
    %v756 = vsub.f32 %v259, %v755
    %v757 = vand.u32 %v756, 4294901760
    %758 = vmatmul.mubr.f32.gmra.mrb[0].mxu0 %v757
    %v759 = vpop.f32.mrb[0].mxu0
    %v760 = vadd.f32 %v633, %v759
    %v761 = vpop.f32.mrb[0].mxu0
    %762 = vmatprep.mubr.f32.mxu0 0.0
    %v763 = vand.u32 %v262, 4294901760
    %v764 = vsub.f32 %v262, %v763
    %v765 = vand.u32 %v764, 4294901760
    %766 = vmatmul.mubr.f32.gmra.mrb[0].mxu0 %v765
    %v767 = vpop.f32.mrb[0].mxu0
    %v768 = vadd.f32 %v640, %v767
    %v769 = vpop.f32.mrb[0].mxu0
    %770 = vmatprep.mubr.f32.mxu0 0.0
    %v771 = vand.u32 %v265, 4294901760
    %v772 = vsub.f32 %v265, %v771
    %v773 = vand.u32 %v772, 4294901760
    %774 = vmatmul.mubr.f32.gmra.mrb[0].mxu0 %v773
    %v775 = vpop.f32.mrb[0].mxu0
    %v776 = vadd.f32 %v647, %v775
    %v777 = vpop.f32.mrb[0].mxu0
    %778 = vmatprep.mubr.f32.mxu0 0.0
    %v779 = vand.u32 %v268, 4294901760
    %v780 = vsub.f32 %v268, %v779
    %v781 = vand.u32 %v780, 4294901760
    %782 = vmatmul.mubr.f32.gmra.mrb[0].mxu0 %v781
    %v783 = vpop.f32.mrb[0].mxu0
    %v784 = vadd.f32 %v654, %v783
    %v785 = vpop.f32.mrb[0].mxu0
    %786 = vdwg.mxu0
    %787 = vmatprep.subr.mxu0 0.0
    %v788 = vand.u32 %v244, 4294901760
    %v789 = vsub.f32 %v244, %v788
    %v790 = vand.u32 %v789, 4294901760
    %791 = vmatpush1.msra.mxu0 %v790
    %792 = vmatprep.subr.mxu0 0.0
    %793 = vmatpush1.msra.mxu0 0.0
    %794 = vmatprep.subr.mxu0 0.0
    %795 = vmatpush1.msra.mxu0 0.0
    %796 = vmatprep.subr.mxu0 0.0
    %797 = vmatpush1.msra.mxu0 0.0
    %798 = vmatprep.subr.mxu0 0.0
    %799 = vmatpush1.msra.mxu0 0.0
    %800 = vmatprep.subr.mxu0 0.0
    %801 = vmatpush1.msra.mxu0 0.0
    %802 = vmatprep.subr.mxu0 0.0
    %803 = vmatpush1.msra.mxu0 0.0
    %804 = vmatprep.subr.mxu0 0.0
    %805 = vmatpush1.msra.mxu0 0.0
    %806 = vmatprep.subr.mxu0 0.0
    %807 = vmatpush1.msra.mxu0 0.0
    %808 = vmatprep.subr.mxu0 0.0
    %809 = vmatpush1.msra.mxu0 0.0
    %810 = vmatprep.subr.mxu0 0.0
    %811 = vmatpush1.msra.mxu0 0.0
    %812 = vmatprep.subr.mxu0 0.0
    %813 = vmatpush1.msra.mxu0 0.0
    %814 = vmatprep.subr.mxu0 0.0
    %815 = vmatpush1.msra.mxu0 0.0
    %816 = vmatprep.subr.mxu0 0.0
    %817 = vmatpush1.msra.mxu0 0.0
    %818 = vmatprep.subr.mxu0 0.0
    %819 = vmatpush1.msra.mxu0 0.0
    %820 = vmatprep.subr.mxu0 0.0
    %821 = vmatpush1.msra.mxu0 0.0
    %822 = vmatprep.subr.mxu0 0.0
    %823 = vmatpush1.msra.mxu0 0.0
    %824 = vmatprep.subr.mxu0 0.0
    %825 = vmatpush1.msra.mxu0 0.0
    %826 = vmatprep.subr.mxu0 0.0
    %827 = vmatpush1.msra.mxu0 0.0
    %828 = vmatprep.subr.mxu0 0.0
    %829 = vmatpush1.msra.mxu0 0.0
    %830 = vmatprep.subr.mxu0 0.0
    %831 = vmatpush1.msra.mxu0 0.0
    %832 = vmatprep.subr.mxu0 0.0
    %833 = vmatpush1.msra.mxu0 0.0
    %834 = vmatprep.subr.mxu0 0.0
    %835 = vmatpush1.msra.mxu0 0.0
    %836 = vmatprep.subr.mxu0 0.0
    %837 = vmatpush1.msra.mxu0 0.0
    %838 = vmatprep.subr.mxu0 0.0
    %839 = vmatpush1.msra.mxu0 0.0
    %840 = vmatprep.subr.mxu0 0.0
    %841 = vmatpush1.msra.mxu0 0.0
    %842 = vmatprep.subr.mxu0 0.0
    %843 = vmatpush1.msra.mxu0 0.0
    %844 = vmatprep.subr.mxu0 0.0
    %845 = vmatpush1.msra.mxu0 0.0
    %846 = vmatprep.subr.mxu0 0.0
    %847 = vmatpush1.msra.mxu0 0.0
    %848 = vmatprep.subr.mxu0 0.0
    %849 = vmatpush1.msra.mxu0 0.0
    %850 = vmatprep.subr.mxu0 0.0
    %851 = vmatpush1.msra.mxu0 0.0
    %852 = vmatprep.subr.mxu0 0.0
    %853 = vmatpush1.msra.mxu0 0.0
    %854 = vmatprep.mubr.f32.mxu0 0.0
    %v855 = vand.u32 %v247, 4294901760
    %856 = vmatmul.mubr.f32.gmra.mrb[0].mxu0 %v855
    %v857 = vpop.f32.mrb[0].mxu0
    %v858 = vadd.f32 %v728, %v857
    %v859 = vpop.f32.mrb[0].mxu0
    %860 = vmatprep.mubr.f32.mxu0 0.0
    %v861 = vand.u32 %v250, 4294901760
    %862 = vmatmul.mubr.f32.gmra.mrb[0].mxu0 %v861
    %v863 = vpop.f32.mrb[0].mxu0
    %v864 = vadd.f32 %v736, %v863
    %v865 = vpop.f32.mrb[0].mxu0
    %866 = vmatprep.mubr.f32.mxu0 0.0
    %v867 = vand.u32 %v253, 4294901760
    %868 = vmatmul.mubr.f32.gmra.mrb[0].mxu0 %v867
    %v869 = vpop.f32.mrb[0].mxu0
    %v870 = vadd.f32 %v744, %v869
    %v871 = vpop.f32.mrb[0].mxu0
    %872 = vmatprep.mubr.f32.mxu0 0.0
    %v873 = vand.u32 %v256, 4294901760
    %874 = vmatmul.mubr.f32.gmra.mrb[0].mxu0 %v873
    %v875 = vpop.f32.mrb[0].mxu0
    %v876 = vadd.f32 %v752, %v875
    %v877 = vpop.f32.mrb[0].mxu0
    %878 = vmatprep.mubr.f32.mxu0 0.0
    %v879 = vand.u32 %v259, 4294901760
    %880 = vmatmul.mubr.f32.gmra.mrb[0].mxu0 %v879
    %v881 = vpop.f32.mrb[0].mxu0
    %v882 = vadd.f32 %v760, %v881
    %v883 = vpop.f32.mrb[0].mxu0
    %884 = vmatprep.mubr.f32.mxu0 0.0
    %v885 = vand.u32 %v262, 4294901760
    %886 = vmatmul.mubr.f32.gmra.mrb[0].mxu0 %v885
    %v887 = vpop.f32.mrb[0].mxu0
    %v888 = vadd.f32 %v768, %v887
    %v889 = vpop.f32.mrb[0].mxu0
    %890 = vmatprep.mubr.f32.mxu0 0.0
    %v891 = vand.u32 %v265, 4294901760
    %892 = vmatmul.mubr.f32.gmra.mrb[0].mxu0 %v891
    %v893 = vpop.f32.mrb[0].mxu0
    %v894 = vadd.f32 %v776, %v893
    %v895 = vpop.f32.mrb[0].mxu0
    %896 = vmatprep.mubr.f32.mxu0 0.0
    %v897 = vand.u32 %v268, 4294901760
    %898 = vmatmul.mubr.f32.gmra.mrb[0].mxu0 %v897
    %v899 = vpop.f32.mrb[0].mxu0
    %v900 = vadd.f32 %v784, %v899
    %v901 = vpop.f32.mrb[0].mxu0
    %902 = vdwg.mxu0
    %903 = vmatprep.subr.mxu0 0.0
    %v904 = vand.u32 %v244, 4294901760
    %905 = vmatpush1.msra.mxu0 %v904
    %906 = vmatprep.subr.mxu0 0.0
    %907 = vmatpush1.msra.mxu0 0.0
    %908 = vmatprep.subr.mxu0 0.0
    %909 = vmatpush1.msra.mxu0 0.0
    %910 = vmatprep.subr.mxu0 0.0
    %911 = vmatpush1.msra.mxu0 0.0
    %912 = vmatprep.subr.mxu0 0.0
    %913 = vmatpush1.msra.mxu0 0.0
    %914 = vmatprep.subr.mxu0 0.0
    %915 = vmatpush1.msra.mxu0 0.0
    %916 = vmatprep.subr.mxu0 0.0
    %917 = vmatpush1.msra.mxu0 0.0
    %918 = vmatprep.subr.mxu0 0.0
    %919 = vmatpush1.msra.mxu0 0.0
    %920 = vmatprep.subr.mxu0 0.0
    %921 = vmatpush1.msra.mxu0 0.0
    %922 = vmatprep.subr.mxu0 0.0
    %923 = vmatpush1.msra.mxu0 0.0
    %924 = vmatprep.subr.mxu0 0.0
    %925 = vmatpush1.msra.mxu0 0.0
    %926 = vmatprep.subr.mxu0 0.0
    %927 = vmatpush1.msra.mxu0 0.0
    %928 = vmatprep.subr.mxu0 0.0
    %929 = vmatpush1.msra.mxu0 0.0
    %930 = vmatprep.subr.mxu0 0.0
    %931 = vmatpush1.msra.mxu0 0.0
    %932 = vmatprep.subr.mxu0 0.0
    %933 = vmatpush1.msra.mxu0 0.0
    %934 = vmatprep.subr.mxu0 0.0
    %935 = vmatpush1.msra.mxu0 0.0
    %936 = vmatprep.subr.mxu0 0.0
    %937 = vmatpush1.msra.mxu0 0.0
    %938 = vmatprep.subr.mxu0 0.0
    %939 = vmatpush1.msra.mxu0 0.0
    %940 = vmatprep.subr.mxu0 0.0
    %941 = vmatpush1.msra.mxu0 0.0
    %942 = vmatprep.subr.mxu0 0.0
    %943 = vmatpush1.msra.mxu0 0.0
    %944 = vmatprep.subr.mxu0 0.0
    %945 = vmatpush1.msra.mxu0 0.0
    %946 = vmatprep.subr.mxu0 0.0
    %947 = vmatpush1.msra.mxu0 0.0
    %948 = vmatprep.subr.mxu0 0.0
    %949 = vmatpush1.msra.mxu0 0.0
    %950 = vmatprep.subr.mxu0 0.0
    %951 = vmatpush1.msra.mxu0 0.0
    %952 = vmatprep.subr.mxu0 0.0
    %953 = vmatpush1.msra.mxu0 0.0
    %954 = vmatprep.subr.mxu0 0.0
    %955 = vmatpush1.msra.mxu0 0.0
    %956 = vmatprep.subr.mxu0 0.0
    %957 = vmatpush1.msra.mxu0 0.0
    %958 = vmatprep.subr.mxu0 0.0
    %959 = vmatpush1.msra.mxu0 0.0
    %960 = vmatprep.subr.mxu0 0.0
    %961 = vmatpush1.msra.mxu0 0.0
    %962 = vmatprep.subr.mxu0 0.0
    %963 = vmatpush1.msra.mxu0 0.0
    %964 = vmatprep.subr.mxu0 0.0
    %965 = vmatpush1.msra.mxu0 0.0
    %966 = vmatprep.subr.mxu0 0.0
    %967 = vmatpush1.msra.mxu0 0.0
    %968 = vmatprep.mubr.f32.mxu0 0.0
    %v969 = vand.u32 %v247, 4294901760
    %970 = vmatmul.mubr.f32.gmra.mrb[0].mxu0 %v969
    %v971 = vpop.f32.mrb[0].mxu0
    %v972 = vadd.f32 %v858, %v971
    %v973 = vpop.f32.mrb[0].mxu0
    %974 = vmatprep.mubr.f32.mxu0 0.0
    %v975 = vand.u32 %v250, 4294901760
    %976 = vmatmul.mubr.f32.gmra.mrb[0].mxu0 %v975
    %v977 = vpop.f32.mrb[0].mxu0
    %v978 = vadd.f32 %v864, %v977
    %v979 = vpop.f32.mrb[0].mxu0
    %980 = vmatprep.mubr.f32.mxu0 0.0
    %v981 = vand.u32 %v253, 4294901760
    %982 = vmatmul.mubr.f32.gmra.mrb[0].mxu0 %v981
    %v983 = vpop.f32.mrb[0].mxu0
    %v984 = vadd.f32 %v870, %v983
    %v985 = vpop.f32.mrb[0].mxu0
    %986 = vmatprep.mubr.f32.mxu0 0.0
    %v987 = vand.u32 %v256, 4294901760
    %988 = vmatmul.mubr.f32.gmra.mrb[0].mxu0 %v987
    %v989 = vpop.f32.mrb[0].mxu0
    %v990 = vadd.f32 %v876, %v989
    %v991 = vpop.f32.mrb[0].mxu0
    %992 = vmatprep.mubr.f32.mxu0 0.0
    %v993 = vand.u32 %v259, 4294901760
    %994 = vmatmul.mubr.f32.gmra.mrb[0].mxu0 %v993
    %v995 = vpop.f32.mrb[0].mxu0
    %v996 = vadd.f32 %v882, %v995
    %v997 = vpop.f32.mrb[0].mxu0
    %998 = vmatprep.mubr.f32.mxu0 0.0
    %v999 = vand.u32 %v262, 4294901760
    %1000 = vmatmul.mubr.f32.gmra.mrb[0].mxu0 %v999
    %v1001 = vpop.f32.mrb[0].mxu0
    %v1002 = vadd.f32 %v888, %v1001
    %v1003 = vpop.f32.mrb[0].mxu0
    %1004 = vmatprep.mubr.f32.mxu0 0.0
    %v1005 = vand.u32 %v265, 4294901760
    %1006 = vmatmul.mubr.f32.gmra.mrb[0].mxu0 %v1005
    %v1007 = vpop.f32.mrb[0].mxu0
    %v1008 = vadd.f32 %v894, %v1007
    %v1009 = vpop.f32.mrb[0].mxu0
    %1010 = vmatprep.mubr.f32.mxu0 0.0
    %v1011 = vand.u32 %v268, 4294901760
    %1012 = vmatmul.mubr.f32.gmra.mrb[0].mxu0 %v1011
    %v1013 = vpop.f32.mrb[0].mxu0
    %v1014 = vadd.f32 %v900, %v1013
    %v1015 = vpop.f32.mrb[0].mxu0
    %1016 = vdwg.mxu0
    %v1017 = vmul.f32 %v972, %v984
    %v1018 = vmul.f32 %v978, %v990
    %v1019 = vmul.f32 %v996, %v1008
    %v1020 = vmul.f32 %v1002, %v1014
    %v1021 = vmul.f32 %v1017, %v1019
    %v1022 = vmul.f32 %v1018, %v1020
    %vm1023 = vcmask 130048
    %v1025 = vsel %vm1023, %v26, 0
    %v1028 = vsel %vm1023, %v27, 0
    %v1031 = vsel %vm1023, %v28, 0
    %v1034 = vsel %vm1023, %v29, 0
    %1036 = vmatprep.subr.mxu0 0.0
    %v1037 = vand.u32 %v1021, 4294901760
    %1038 = vmatpush1.msra.mxu0 %v1037
    %1039 = vmatprep.subr.mxu0 0.0
    %v1040 = vand.u32 %v1022, 4294901760
    %1041 = vmatpush1.msra.mxu0 %v1040
    %1042 = vmatprep.subr.mxu0 0.0
    %1043 = vmatpush1.msra.mxu0 0.0
    %1044 = vmatprep.subr.mxu0 0.0
    %1045 = vmatpush1.msra.mxu0 0.0
    %1046 = vmatprep.subr.mxu0 0.0
    %1047 = vmatpush1.msra.mxu0 0.0
    %1048 = vmatprep.subr.mxu0 0.0
    %1049 = vmatpush1.msra.mxu0 0.0
    %1050 = vmatprep.subr.mxu0 0.0
    %1051 = vmatpush1.msra.mxu0 0.0
    %1052 = vmatprep.subr.mxu0 0.0
    %1053 = vmatpush1.msra.mxu0 0.0
    %1054 = vmatprep.subr.mxu0 0.0
    %1055 = vmatpush1.msra.mxu0 0.0
    %1056 = vmatprep.subr.mxu0 0.0
    %1057 = vmatpush1.msra.mxu0 0.0
    %1058 = vmatprep.subr.mxu0 0.0
    %1059 = vmatpush1.msra.mxu0 0.0
    %1060 = vmatprep.subr.mxu0 0.0
    %1061 = vmatpush1.msra.mxu0 0.0
    %1062 = vmatprep.subr.mxu0 0.0
    %1063 = vmatpush1.msra.mxu0 0.0
    %1064 = vmatprep.subr.mxu0 0.0
    %1065 = vmatpush1.msra.mxu0 0.0
    %1066 = vmatprep.subr.mxu0 0.0
    %1067 = vmatpush1.msra.mxu0 0.0
    %1068 = vmatprep.subr.mxu0 0.0
    %1069 = vmatpush1.msra.mxu0 0.0
    %1070 = vmatprep.subr.mxu0 0.0
    %1071 = vmatpush1.msra.mxu0 0.0
    %1072 = vmatprep.subr.mxu0 0.0
    %1073 = vmatpush1.msra.mxu0 0.0
    %1074 = vmatprep.subr.mxu0 0.0
    %1075 = vmatpush1.msra.mxu0 0.0
    %1076 = vmatprep.subr.mxu0 0.0
    %1077 = vmatpush1.msra.mxu0 0.0
    %1078 = vmatprep.subr.mxu0 0.0
    %1079 = vmatpush1.msra.mxu0 0.0
    %1080 = vmatprep.subr.mxu0 0.0
    %1081 = vmatpush1.msra.mxu0 0.0
    %1082 = vmatprep.subr.mxu0 0.0
    %1083 = vmatpush1.msra.mxu0 0.0
    %1084 = vmatprep.subr.mxu0 0.0
    %1085 = vmatpush1.msra.mxu0 0.0
    %1086 = vmatprep.subr.mxu0 0.0
    %1087 = vmatpush1.msra.mxu0 0.0
    %1088 = vmatprep.subr.mxu0 0.0
    %1089 = vmatpush1.msra.mxu0 0.0
    %1090 = vmatprep.subr.mxu0 0.0
    %1091 = vmatpush1.msra.mxu0 0.0
    %1092 = vmatprep.subr.mxu0 0.0
    %1093 = vmatpush1.msra.mxu0 0.0
    %1094 = vmatprep.subr.mxu0 0.0
    %1095 = vmatpush1.msra.mxu0 0.0
    %1096 = vmatprep.subr.mxu0 0.0
    %1097 = vmatpush1.msra.mxu0 0.0
    %1098 = vmatprep.subr.mxu0 0.0
    %1099 = vmatpush1.msra.mxu0 0.0
    %1100 = vmatprep.subr.mxu0 0.0
    %1101 = vmatpush1.msra.mxu0 0.0
    %1102 = vmatprep.mubr.f32.mxu0 0.0
    %v1103 = vand.u32 %v1025, 4294901760
    %v1104 = vsub.f32 %v1025, %v1103
    %v1105 = vand.u32 %v1104, 4294901760
    %v1106 = vsub.f32 %v1104, %v1105
    %v1107 = vand.u32 %v1106, 4294901760
    %1108 = vmatmul.mubr.f32.gmra.mrb[0].mxu0 %v1107
    %v1109 = vpop.f32.mrb[0].mxu0
    %v1110 = vadd.f32 0.0, %v1109
    %v1111 = vpop.f32.mrb[0].mxu0
    %1112 = vmatprep.mubr.f32.mxu0 0.0
    %v1113 = vand.u32 %v1028, 4294901760
    %v1114 = vsub.f32 %v1028, %v1113
    %v1115 = vand.u32 %v1114, 4294901760
    %v1116 = vsub.f32 %v1114, %v1115
    %v1117 = vand.u32 %v1116, 4294901760
    %1118 = vmatmul.mubr.f32.gmra.mrb[0].mxu0 %v1117
    %v1119 = vpop.f32.mrb[0].mxu0
    %v1120 = vadd.f32 0.0, %v1119
    %v1121 = vpop.f32.mrb[0].mxu0
    %1122 = vmatprep.mubr.f32.mxu0 0.0
    %v1123 = vand.u32 %v1031, 4294901760
    %v1124 = vsub.f32 %v1031, %v1123
    %v1125 = vand.u32 %v1124, 4294901760
    %v1126 = vsub.f32 %v1124, %v1125
    %v1127 = vand.u32 %v1126, 4294901760
    %1128 = vmatmul.mubr.f32.gmra.mrb[0].mxu0 %v1127
    %v1129 = vpop.f32.mrb[0].mxu0
    %v1130 = vadd.f32 0.0, %v1129
    %v1131 = vpop.f32.mrb[0].mxu0
    %1132 = vmatprep.mubr.f32.mxu0 0.0
    %v1133 = vand.u32 %v1034, 4294901760
    %v1134 = vsub.f32 %v1034, %v1133
    %v1135 = vand.u32 %v1134, 4294901760
    %v1136 = vsub.f32 %v1134, %v1135
    %v1137 = vand.u32 %v1136, 4294901760
    %1138 = vmatmul.mubr.f32.gmra.mrb[0].mxu0 %v1137
    %v1139 = vpop.f32.mrb[0].mxu0
    %v1140 = vadd.f32 0.0, %v1139
    %v1141 = vpop.f32.mrb[0].mxu0
    %1142 = vdwg.mxu0
    %1143 = vmatprep.subr.mxu0 0.0
    %v1144 = vand.u32 %v1021, 4294901760
    %v1145 = vsub.f32 %v1021, %v1144
    %v1146 = vand.u32 %v1145, 4294901760
    %v1147 = vsub.f32 %v1145, %v1146
    %v1148 = vand.u32 %v1147, 4294901760
    %1149 = vmatpush1.msra.mxu0 %v1148
    %1150 = vmatprep.subr.mxu0 0.0
    %v1151 = vand.u32 %v1022, 4294901760
    %v1152 = vsub.f32 %v1022, %v1151
    %v1153 = vand.u32 %v1152, 4294901760
    %v1154 = vsub.f32 %v1152, %v1153
    %v1155 = vand.u32 %v1154, 4294901760
    %1156 = vmatpush1.msra.mxu0 %v1155
    %1157 = vmatprep.subr.mxu0 0.0
    %1158 = vmatpush1.msra.mxu0 0.0
    %1159 = vmatprep.subr.mxu0 0.0
    %1160 = vmatpush1.msra.mxu0 0.0
    %1161 = vmatprep.subr.mxu0 0.0
    %1162 = vmatpush1.msra.mxu0 0.0
    %1163 = vmatprep.subr.mxu0 0.0
    %1164 = vmatpush1.msra.mxu0 0.0
    %1165 = vmatprep.subr.mxu0 0.0
    %1166 = vmatpush1.msra.mxu0 0.0
    %1167 = vmatprep.subr.mxu0 0.0
    %1168 = vmatpush1.msra.mxu0 0.0
    %1169 = vmatprep.subr.mxu0 0.0
    %1170 = vmatpush1.msra.mxu0 0.0
    %1171 = vmatprep.subr.mxu0 0.0
    %1172 = vmatpush1.msra.mxu0 0.0
    %1173 = vmatprep.subr.mxu0 0.0
    %1174 = vmatpush1.msra.mxu0 0.0
    %1175 = vmatprep.subr.mxu0 0.0
    %1176 = vmatpush1.msra.mxu0 0.0
    %1177 = vmatprep.subr.mxu0 0.0
    %1178 = vmatpush1.msra.mxu0 0.0
    %1179 = vmatprep.subr.mxu0 0.0
    %1180 = vmatpush1.msra.mxu0 0.0
    %1181 = vmatprep.subr.mxu0 0.0
    %1182 = vmatpush1.msra.mxu0 0.0
    %1183 = vmatprep.subr.mxu0 0.0
    %1184 = vmatpush1.msra.mxu0 0.0
    %1185 = vmatprep.subr.mxu0 0.0
    %1186 = vmatpush1.msra.mxu0 0.0
    %1187 = vmatprep.subr.mxu0 0.0
    %1188 = vmatpush1.msra.mxu0 0.0
    %1189 = vmatprep.subr.mxu0 0.0
    %1190 = vmatpush1.msra.mxu0 0.0
    %1191 = vmatprep.subr.mxu0 0.0
    %1192 = vmatpush1.msra.mxu0 0.0
    %1193 = vmatprep.subr.mxu0 0.0
    %1194 = vmatpush1.msra.mxu0 0.0
    %1195 = vmatprep.subr.mxu0 0.0
    %1196 = vmatpush1.msra.mxu0 0.0
    %1197 = vmatprep.subr.mxu0 0.0
    %1198 = vmatpush1.msra.mxu0 0.0
    %1199 = vmatprep.subr.mxu0 0.0
    %1200 = vmatpush1.msra.mxu0 0.0
    %1201 = vmatprep.subr.mxu0 0.0
    %1202 = vmatpush1.msra.mxu0 0.0
    %1203 = vmatprep.subr.mxu0 0.0
    %1204 = vmatpush1.msra.mxu0 0.0
    %1205 = vmatprep.subr.mxu0 0.0
    %1206 = vmatpush1.msra.mxu0 0.0
    %1207 = vmatprep.subr.mxu0 0.0
    %1208 = vmatpush1.msra.mxu0 0.0
    %1209 = vmatprep.subr.mxu0 0.0
    %1210 = vmatpush1.msra.mxu0 0.0
    %1211 = vmatprep.subr.mxu0 0.0
    %1212 = vmatpush1.msra.mxu0 0.0
    %1213 = vmatprep.subr.mxu0 0.0
    %1214 = vmatpush1.msra.mxu0 0.0
    %1215 = vmatprep.subr.mxu0 0.0
    %1216 = vmatpush1.msra.mxu0 0.0
    %1217 = vmatprep.mubr.f32.mxu0 0.0
    %v1218 = vand.u32 %v1025, 4294901760
    %1219 = vmatmul.mubr.f32.gmra.mrb[0].mxu0 %v1218
    %v1220 = vpop.f32.mrb[0].mxu0
    %v1221 = vadd.f32 %v1110, %v1220
    %v1222 = vpop.f32.mrb[0].mxu0
    %1223 = vmatprep.mubr.f32.mxu0 0.0
    %v1224 = vand.u32 %v1028, 4294901760
    %1225 = vmatmul.mubr.f32.gmra.mrb[0].mxu0 %v1224
    %v1226 = vpop.f32.mrb[0].mxu0
    %v1227 = vadd.f32 %v1120, %v1226
    %v1228 = vpop.f32.mrb[0].mxu0
    %1229 = vmatprep.mubr.f32.mxu0 0.0
    %v1230 = vand.u32 %v1031, 4294901760
    %1231 = vmatmul.mubr.f32.gmra.mrb[0].mxu0 %v1230
    %v1232 = vpop.f32.mrb[0].mxu0
    %v1233 = vadd.f32 %v1130, %v1232
    %v1234 = vpop.f32.mrb[0].mxu0
    %1235 = vmatprep.mubr.f32.mxu0 0.0
    %v1236 = vand.u32 %v1034, 4294901760
    %1237 = vmatmul.mubr.f32.gmra.mrb[0].mxu0 %v1236
    %v1238 = vpop.f32.mrb[0].mxu0
    %v1239 = vadd.f32 %v1140, %v1238
    %v1240 = vpop.f32.mrb[0].mxu0
    %1241 = vdwg.mxu0
    %1242 = vmatprep.subr.mxu0 0.0
    %v1243 = vand.u32 %v1021, 4294901760
    %v1244 = vsub.f32 %v1021, %v1243
    %1245 = vmatpush1.msra.mxu0 %v1244
    %1246 = vmatprep.subr.mxu0 0.0
    %v1247 = vand.u32 %v1022, 4294901760
    %v1248 = vsub.f32 %v1022, %v1247
    %1249 = vmatpush1.msra.mxu0 %v1248
    %1250 = vmatprep.subr.mxu0 0.0
    %1251 = vmatpush1.msra.mxu0 0.0
    %1252 = vmatprep.subr.mxu0 0.0
    %1253 = vmatpush1.msra.mxu0 0.0
    %1254 = vmatprep.subr.mxu0 0.0
    %1255 = vmatpush1.msra.mxu0 0.0
    %1256 = vmatprep.subr.mxu0 0.0
    %1257 = vmatpush1.msra.mxu0 0.0
    %1258 = vmatprep.subr.mxu0 0.0
    %1259 = vmatpush1.msra.mxu0 0.0
    %1260 = vmatprep.subr.mxu0 0.0
    %1261 = vmatpush1.msra.mxu0 0.0
    %1262 = vmatprep.subr.mxu0 0.0
    %1263 = vmatpush1.msra.mxu0 0.0
    %1264 = vmatprep.subr.mxu0 0.0
    %1265 = vmatpush1.msra.mxu0 0.0
    %1266 = vmatprep.subr.mxu0 0.0
    %1267 = vmatpush1.msra.mxu0 0.0
    %1268 = vmatprep.subr.mxu0 0.0
    %1269 = vmatpush1.msra.mxu0 0.0
    %1270 = vmatprep.subr.mxu0 0.0
    %1271 = vmatpush1.msra.mxu0 0.0
    %1272 = vmatprep.subr.mxu0 0.0
    %1273 = vmatpush1.msra.mxu0 0.0
    %1274 = vmatprep.subr.mxu0 0.0
    %1275 = vmatpush1.msra.mxu0 0.0
    %1276 = vmatprep.subr.mxu0 0.0
    %1277 = vmatpush1.msra.mxu0 0.0
    %1278 = vmatprep.subr.mxu0 0.0
    %1279 = vmatpush1.msra.mxu0 0.0
    %1280 = vmatprep.subr.mxu0 0.0
    %1281 = vmatpush1.msra.mxu0 0.0
    %1282 = vmatprep.subr.mxu0 0.0
    %1283 = vmatpush1.msra.mxu0 0.0
    %1284 = vmatprep.subr.mxu0 0.0
    %1285 = vmatpush1.msra.mxu0 0.0
    %1286 = vmatprep.subr.mxu0 0.0
    %1287 = vmatpush1.msra.mxu0 0.0
    %1288 = vmatprep.subr.mxu0 0.0
    %1289 = vmatpush1.msra.mxu0 0.0
    %1290 = vmatprep.subr.mxu0 0.0
    %1291 = vmatpush1.msra.mxu0 0.0
    %1292 = vmatprep.subr.mxu0 0.0
    %1293 = vmatpush1.msra.mxu0 0.0
    %1294 = vmatprep.subr.mxu0 0.0
    %1295 = vmatpush1.msra.mxu0 0.0
    %1296 = vmatprep.subr.mxu0 0.0
    %1297 = vmatpush1.msra.mxu0 0.0
    %1298 = vmatprep.subr.mxu0 0.0
    %1299 = vmatpush1.msra.mxu0 0.0
    %1300 = vmatprep.subr.mxu0 0.0
    %1301 = vmatpush1.msra.mxu0 0.0
    %1302 = vmatprep.subr.mxu0 0.0
    %1303 = vmatpush1.msra.mxu0 0.0
    %1304 = vmatprep.subr.mxu0 0.0
    %1305 = vmatpush1.msra.mxu0 0.0
    %1306 = vmatprep.subr.mxu0 0.0
    %1307 = vmatpush1.msra.mxu0 0.0
    %1308 = vmatprep.subr.mxu0 0.0
    %1309 = vmatpush1.msra.mxu0 0.0
    %1310 = vmatprep.mubr.f32.mxu0 0.0
    %v1311 = vand.u32 %v1025, 4294901760
    %v1312 = vsub.f32 %v1025, %v1311
    %1313 = vmatmul.mubr.f32.gmra.mrb[0].mxu0 %v1312
    %v1314 = vpop.f32.mrb[0].mxu0
    %v1315 = vadd.f32 %v1221, %v1314
    %v1316 = vpop.f32.mrb[0].mxu0
    %1317 = vmatprep.mubr.f32.mxu0 0.0
    %v1318 = vand.u32 %v1028, 4294901760
    %v1319 = vsub.f32 %v1028, %v1318
    %1320 = vmatmul.mubr.f32.gmra.mrb[0].mxu0 %v1319
    %v1321 = vpop.f32.mrb[0].mxu0
    %v1322 = vadd.f32 %v1227, %v1321
    %v1323 = vpop.f32.mrb[0].mxu0
    %1324 = vmatprep.mubr.f32.mxu0 0.0
    %v1325 = vand.u32 %v1031, 4294901760
    %v1326 = vsub.f32 %v1031, %v1325
    %1327 = vmatmul.mubr.f32.gmra.mrb[0].mxu0 %v1326
    %v1328 = vpop.f32.mrb[0].mxu0
    %v1329 = vadd.f32 %v1233, %v1328
    %v1330 = vpop.f32.mrb[0].mxu0
    %1331 = vmatprep.mubr.f32.mxu0 0.0
    %v1332 = vand.u32 %v1034, 4294901760
    %v1333 = vsub.f32 %v1034, %v1332
    %1334 = vmatmul.mubr.f32.gmra.mrb[0].mxu0 %v1333
    %v1335 = vpop.f32.mrb[0].mxu0
    %v1336 = vadd.f32 %v1239, %v1335
    %v1337 = vpop.f32.mrb[0].mxu0
    %1338 = vdwg.mxu0
    %1339 = vmatprep.subr.mxu0 0.0
    %v1340 = vand.u32 %v1021, 4294901760
    %1341 = vmatpush1.msra.mxu0 %v1340
    %1342 = vmatprep.subr.mxu0 0.0
    %v1343 = vand.u32 %v1022, 4294901760
    %1344 = vmatpush1.msra.mxu0 %v1343
    %1345 = vmatprep.subr.mxu0 0.0
    %1346 = vmatpush1.msra.mxu0 0.0
    %1347 = vmatprep.subr.mxu0 0.0
    %1348 = vmatpush1.msra.mxu0 0.0
    %1349 = vmatprep.subr.mxu0 0.0
    %1350 = vmatpush1.msra.mxu0 0.0
    %1351 = vmatprep.subr.mxu0 0.0
    %1352 = vmatpush1.msra.mxu0 0.0
    %1353 = vmatprep.subr.mxu0 0.0
    %1354 = vmatpush1.msra.mxu0 0.0
    %1355 = vmatprep.subr.mxu0 0.0
    %1356 = vmatpush1.msra.mxu0 0.0
    %1357 = vmatprep.subr.mxu0 0.0
    %1358 = vmatpush1.msra.mxu0 0.0
    %1359 = vmatprep.subr.mxu0 0.0
    %1360 = vmatpush1.msra.mxu0 0.0
    %1361 = vmatprep.subr.mxu0 0.0
    %1362 = vmatpush1.msra.mxu0 0.0
    %1363 = vmatprep.subr.mxu0 0.0
    %1364 = vmatpush1.msra.mxu0 0.0
    %1365 = vmatprep.subr.mxu0 0.0
    %1366 = vmatpush1.msra.mxu0 0.0
    %1367 = vmatprep.subr.mxu0 0.0
    %1368 = vmatpush1.msra.mxu0 0.0
    %1369 = vmatprep.subr.mxu0 0.0
    %1370 = vmatpush1.msra.mxu0 0.0
    %1371 = vmatprep.subr.mxu0 0.0
    %1372 = vmatpush1.msra.mxu0 0.0
    %1373 = vmatprep.subr.mxu0 0.0
    %1374 = vmatpush1.msra.mxu0 0.0
    %1375 = vmatprep.subr.mxu0 0.0
    %1376 = vmatpush1.msra.mxu0 0.0
    %1377 = vmatprep.subr.mxu0 0.0
    %1378 = vmatpush1.msra.mxu0 0.0
    %1379 = vmatprep.subr.mxu0 0.0
    %1380 = vmatpush1.msra.mxu0 0.0
    %1381 = vmatprep.subr.mxu0 0.0
    %1382 = vmatpush1.msra.mxu0 0.0
    %1383 = vmatprep.subr.mxu0 0.0
    %1384 = vmatpush1.msra.mxu0 0.0
    %1385 = vmatprep.subr.mxu0 0.0
    %1386 = vmatpush1.msra.mxu0 0.0
    %1387 = vmatprep.subr.mxu0 0.0
    %1388 = vmatpush1.msra.mxu0 0.0
    %1389 = vmatprep.subr.mxu0 0.0
    %1390 = vmatpush1.msra.mxu0 0.0
    %1391 = vmatprep.subr.mxu0 0.0
    %1392 = vmatpush1.msra.mxu0 0.0
    %1393 = vmatprep.subr.mxu0 0.0
    %1394 = vmatpush1.msra.mxu0 0.0
    %1395 = vmatprep.subr.mxu0 0.0
    %1396 = vmatpush1.msra.mxu0 0.0
    %1397 = vmatprep.subr.mxu0 0.0
    %1398 = vmatpush1.msra.mxu0 0.0
    %1399 = vmatprep.subr.mxu0 0.0
    %1400 = vmatpush1.msra.mxu0 0.0
    %1401 = vmatprep.subr.mxu0 0.0
    %1402 = vmatpush1.msra.mxu0 0.0
    %1403 = vmatprep.subr.mxu0 0.0
    %1404 = vmatpush1.msra.mxu0 0.0
    %1405 = vmatprep.mubr.f32.mxu0 0.0
    %v1406 = vand.u32 %v1025, 4294901760
    %v1407 = vsub.f32 %v1025, %v1406
    %v1408 = vand.u32 %v1407, 4294901760
    %1409 = vmatmul.mubr.f32.gmra.mrb[0].mxu0 %v1408
    %v1410 = vpop.f32.mrb[0].mxu0
    %v1411 = vadd.f32 %v1315, %v1410
    %v1412 = vpop.f32.mrb[0].mxu0
    %1413 = vmatprep.mubr.f32.mxu0 0.0
    %v1414 = vand.u32 %v1028, 4294901760
    %v1415 = vsub.f32 %v1028, %v1414
    %v1416 = vand.u32 %v1415, 4294901760
    %1417 = vmatmul.mubr.f32.gmra.mrb[0].mxu0 %v1416
    %v1418 = vpop.f32.mrb[0].mxu0
    %v1419 = vadd.f32 %v1322, %v1418
    %v1420 = vpop.f32.mrb[0].mxu0
    %1421 = vmatprep.mubr.f32.mxu0 0.0
    %v1422 = vand.u32 %v1031, 4294901760
    %v1423 = vsub.f32 %v1031, %v1422
    %v1424 = vand.u32 %v1423, 4294901760
    %1425 = vmatmul.mubr.f32.gmra.mrb[0].mxu0 %v1424
    %v1426 = vpop.f32.mrb[0].mxu0
    %v1427 = vadd.f32 %v1329, %v1426
    %v1428 = vpop.f32.mrb[0].mxu0
    %1429 = vmatprep.mubr.f32.mxu0 0.0
    %v1430 = vand.u32 %v1034, 4294901760
    %v1431 = vsub.f32 %v1034, %v1430
    %v1432 = vand.u32 %v1431, 4294901760
    %1433 = vmatmul.mubr.f32.gmra.mrb[0].mxu0 %v1432
    %v1434 = vpop.f32.mrb[0].mxu0
    %v1435 = vadd.f32 %v1336, %v1434
    %v1436 = vpop.f32.mrb[0].mxu0
    %1437 = vdwg.mxu0
    %1438 = vmatprep.subr.mxu0 0.0
    %v1439 = vand.u32 %v1021, 4294901760
    %v1440 = vsub.f32 %v1021, %v1439
    %v1441 = vand.u32 %v1440, 4294901760
    %1442 = vmatpush1.msra.mxu0 %v1441
    %1443 = vmatprep.subr.mxu0 0.0
    %v1444 = vand.u32 %v1022, 4294901760
    %v1445 = vsub.f32 %v1022, %v1444
    %v1446 = vand.u32 %v1445, 4294901760
    %1447 = vmatpush1.msra.mxu0 %v1446
    %1448 = vmatprep.subr.mxu0 0.0
    %1449 = vmatpush1.msra.mxu0 0.0
    %1450 = vmatprep.subr.mxu0 0.0
    %1451 = vmatpush1.msra.mxu0 0.0
    %1452 = vmatprep.subr.mxu0 0.0
    %1453 = vmatpush1.msra.mxu0 0.0
    %1454 = vmatprep.subr.mxu0 0.0
    %1455 = vmatpush1.msra.mxu0 0.0
    %1456 = vmatprep.subr.mxu0 0.0
    %1457 = vmatpush1.msra.mxu0 0.0
    %1458 = vmatprep.subr.mxu0 0.0
    %1459 = vmatpush1.msra.mxu0 0.0
    %1460 = vmatprep.subr.mxu0 0.0
    %1461 = vmatpush1.msra.mxu0 0.0
    %1462 = vmatprep.subr.mxu0 0.0
    %1463 = vmatpush1.msra.mxu0 0.0
    %1464 = vmatprep.subr.mxu0 0.0
    %1465 = vmatpush1.msra.mxu0 0.0
    %1466 = vmatprep.subr.mxu0 0.0
    %1467 = vmatpush1.msra.mxu0 0.0
    %1468 = vmatprep.subr.mxu0 0.0
    %1469 = vmatpush1.msra.mxu0 0.0
    %1470 = vmatprep.subr.mxu0 0.0
    %1471 = vmatpush1.msra.mxu0 0.0
    %1472 = vmatprep.subr.mxu0 0.0
    %1473 = vmatpush1.msra.mxu0 0.0
    %1474 = vmatprep.subr.mxu0 0.0
    %1475 = vmatpush1.msra.mxu0 0.0
    %1476 = vmatprep.subr.mxu0 0.0
    %1477 = vmatpush1.msra.mxu0 0.0
    %1478 = vmatprep.subr.mxu0 0.0
    %1479 = vmatpush1.msra.mxu0 0.0
    %1480 = vmatprep.subr.mxu0 0.0
    %1481 = vmatpush1.msra.mxu0 0.0
    %1482 = vmatprep.subr.mxu0 0.0
    %1483 = vmatpush1.msra.mxu0 0.0
    %1484 = vmatprep.subr.mxu0 0.0
    %1485 = vmatpush1.msra.mxu0 0.0
    %1486 = vmatprep.subr.mxu0 0.0
    %1487 = vmatpush1.msra.mxu0 0.0
    %1488 = vmatprep.subr.mxu0 0.0
    %1489 = vmatpush1.msra.mxu0 0.0
    %1490 = vmatprep.subr.mxu0 0.0
    %1491 = vmatpush1.msra.mxu0 0.0
    %1492 = vmatprep.subr.mxu0 0.0
    %1493 = vmatpush1.msra.mxu0 0.0
    %1494 = vmatprep.subr.mxu0 0.0
    %1495 = vmatpush1.msra.mxu0 0.0
    %1496 = vmatprep.subr.mxu0 0.0
    %1497 = vmatpush1.msra.mxu0 0.0
    %1498 = vmatprep.subr.mxu0 0.0
    %1499 = vmatpush1.msra.mxu0 0.0
    %1500 = vmatprep.subr.mxu0 0.0
    %1501 = vmatpush1.msra.mxu0 0.0
    %1502 = vmatprep.subr.mxu0 0.0
    %1503 = vmatpush1.msra.mxu0 0.0
    %1504 = vmatprep.subr.mxu0 0.0
    %1505 = vmatpush1.msra.mxu0 0.0
    %1506 = vmatprep.subr.mxu0 0.0
    %1507 = vmatpush1.msra.mxu0 0.0
    %1508 = vmatprep.mubr.f32.mxu0 0.0
    %v1509 = vand.u32 %v1025, 4294901760
    %1510 = vmatmul.mubr.f32.gmra.mrb[0].mxu0 %v1509
    %v1511 = vpop.f32.mrb[0].mxu0
    %v1512 = vadd.f32 %v1411, %v1511
    %v1513 = vpop.f32.mrb[0].mxu0
    %1514 = vmatprep.mubr.f32.mxu0 0.0
    %v1515 = vand.u32 %v1028, 4294901760
    %1516 = vmatmul.mubr.f32.gmra.mrb[0].mxu0 %v1515
    %v1517 = vpop.f32.mrb[0].mxu0
    %v1518 = vadd.f32 %v1419, %v1517
    %v1519 = vpop.f32.mrb[0].mxu0
    %1520 = vmatprep.mubr.f32.mxu0 0.0
    %v1521 = vand.u32 %v1031, 4294901760
    %1522 = vmatmul.mubr.f32.gmra.mrb[0].mxu0 %v1521
    %v1523 = vpop.f32.mrb[0].mxu0
    %v1524 = vadd.f32 %v1427, %v1523
    %v1525 = vpop.f32.mrb[0].mxu0
    %1526 = vmatprep.mubr.f32.mxu0 0.0
    %v1527 = vand.u32 %v1034, 4294901760
    %1528 = vmatmul.mubr.f32.gmra.mrb[0].mxu0 %v1527
    %v1529 = vpop.f32.mrb[0].mxu0
    %v1530 = vadd.f32 %v1435, %v1529
    %v1531 = vpop.f32.mrb[0].mxu0
    %1532 = vdwg.mxu0
    %1533 = vmatprep.subr.mxu0 0.0
    %v1534 = vand.u32 %v1021, 4294901760
    %1535 = vmatpush1.msra.mxu0 %v1534
    %1536 = vmatprep.subr.mxu0 0.0
    %v1537 = vand.u32 %v1022, 4294901760
    %1538 = vmatpush1.msra.mxu0 %v1537
    %1539 = vmatprep.subr.mxu0 0.0
    %1540 = vmatpush1.msra.mxu0 0.0
    %1541 = vmatprep.subr.mxu0 0.0
    %1542 = vmatpush1.msra.mxu0 0.0
    %1543 = vmatprep.subr.mxu0 0.0
    %1544 = vmatpush1.msra.mxu0 0.0
    %1545 = vmatprep.subr.mxu0 0.0
    %1546 = vmatpush1.msra.mxu0 0.0
    %1547 = vmatprep.subr.mxu0 0.0
    %1548 = vmatpush1.msra.mxu0 0.0
    %1549 = vmatprep.subr.mxu0 0.0
    %1550 = vmatpush1.msra.mxu0 0.0
    %1551 = vmatprep.subr.mxu0 0.0
    %1552 = vmatpush1.msra.mxu0 0.0
    %1553 = vmatprep.subr.mxu0 0.0
    %1554 = vmatpush1.msra.mxu0 0.0
    %1555 = vmatprep.subr.mxu0 0.0
    %1556 = vmatpush1.msra.mxu0 0.0
    %1557 = vmatprep.subr.mxu0 0.0
    %1558 = vmatpush1.msra.mxu0 0.0
    %1559 = vmatprep.subr.mxu0 0.0
    %1560 = vmatpush1.msra.mxu0 0.0
    %1561 = vmatprep.subr.mxu0 0.0
    %1562 = vmatpush1.msra.mxu0 0.0
    %1563 = vmatprep.subr.mxu0 0.0
    %1564 = vmatpush1.msra.mxu0 0.0
    %1565 = vmatprep.subr.mxu0 0.0
    %1566 = vmatpush1.msra.mxu0 0.0
    %1567 = vmatprep.subr.mxu0 0.0
    %1568 = vmatpush1.msra.mxu0 0.0
    %1569 = vmatprep.subr.mxu0 0.0
    %1570 = vmatpush1.msra.mxu0 0.0
    %1571 = vmatprep.subr.mxu0 0.0
    %1572 = vmatpush1.msra.mxu0 0.0
    %1573 = vmatprep.subr.mxu0 0.0
    %1574 = vmatpush1.msra.mxu0 0.0
    %1575 = vmatprep.subr.mxu0 0.0
    %1576 = vmatpush1.msra.mxu0 0.0
    %1577 = vmatprep.subr.mxu0 0.0
    %1578 = vmatpush1.msra.mxu0 0.0
    %1579 = vmatprep.subr.mxu0 0.0
    %1580 = vmatpush1.msra.mxu0 0.0
    %1581 = vmatprep.subr.mxu0 0.0
    %1582 = vmatpush1.msra.mxu0 0.0
    %1583 = vmatprep.subr.mxu0 0.0
    %1584 = vmatpush1.msra.mxu0 0.0
    %1585 = vmatprep.subr.mxu0 0.0
    %1586 = vmatpush1.msra.mxu0 0.0
    %1587 = vmatprep.subr.mxu0 0.0
    %1588 = vmatpush1.msra.mxu0 0.0
    %1589 = vmatprep.subr.mxu0 0.0
    %1590 = vmatpush1.msra.mxu0 0.0
    %1591 = vmatprep.subr.mxu0 0.0
    %1592 = vmatpush1.msra.mxu0 0.0
    %1593 = vmatprep.subr.mxu0 0.0
    %1594 = vmatpush1.msra.mxu0 0.0
    %1595 = vmatprep.subr.mxu0 0.0
    %1596 = vmatpush1.msra.mxu0 0.0
    %1597 = vmatprep.subr.mxu0 0.0
    %1598 = vmatpush1.msra.mxu0 0.0
    %1599 = vmatprep.mubr.f32.mxu0 0.0
    %v1600 = vand.u32 %v1025, 4294901760
    %1601 = vmatmul.mubr.f32.gmra.mrb[0].mxu0 %v1600
    %v1602 = vpop.f32.mrb[0].mxu0
    %v1603 = vadd.f32 %v1512, %v1602
    %v1604 = vpop.f32.mrb[0].mxu0
    %1605 = vmatprep.mubr.f32.mxu0 0.0
    %v1606 = vand.u32 %v1028, 4294901760
    %1607 = vmatmul.mubr.f32.gmra.mrb[0].mxu0 %v1606
    %v1608 = vpop.f32.mrb[0].mxu0
    %v1609 = vadd.f32 %v1518, %v1608
    %v1610 = vpop.f32.mrb[0].mxu0
    %1611 = vmatprep.mubr.f32.mxu0 0.0
    %v1612 = vand.u32 %v1031, 4294901760
    %1613 = vmatmul.mubr.f32.gmra.mrb[0].mxu0 %v1612
    %v1614 = vpop.f32.mrb[0].mxu0
    %v1615 = vadd.f32 %v1524, %v1614
    %v1616 = vpop.f32.mrb[0].mxu0
    %1617 = vmatprep.mubr.f32.mxu0 0.0
    %v1618 = vand.u32 %v1034, 4294901760
    %1619 = vmatmul.mubr.f32.gmra.mrb[0].mxu0 %v1618
    %v1620 = vpop.f32.mrb[0].mxu0
    %v1621 = vadd.f32 %v1530, %v1620
    %v1622 = vpop.f32.mrb[0].mxu0
    %1623 = vdwg.mxu0
    %v1624 = vmul.f32 %v1603, %v1603
    %v1625 = vmul.f32 %v1609, %v1609
    %v1626 = vmul.f32 %v1615, %v1615
    %v1627 = vmul.f32 %v1621, %v1621
    %vm1628 = vcmask 261120
    %v1630 = vsel %vm1628, %v30, 0
    %1632 = vmatprep.subr.mxu0 0.0
    %v1633 = vand.u32 %v1624, 4294901760
    %1634 = vmatpush1.msra.mxu0 %v1633
    %1635 = vmatprep.subr.mxu0 0.0
    %v1636 = vand.u32 %v1625, 4294901760
    %1637 = vmatpush1.msra.mxu0 %v1636
    %1638 = vmatprep.subr.mxu0 0.0
    %v1639 = vand.u32 %v1626, 4294901760
    %1640 = vmatpush1.msra.mxu0 %v1639
    %1641 = vmatprep.subr.mxu0 0.0
    %v1642 = vand.u32 %v1627, 4294901760
    %1643 = vmatpush1.msra.mxu0 %v1642
    %1644 = vmatprep.subr.mxu0 0.0
    %1645 = vmatpush1.msra.mxu0 0.0
    %1646 = vmatprep.subr.mxu0 0.0
    %1647 = vmatpush1.msra.mxu0 0.0
    %1648 = vmatprep.subr.mxu0 0.0
    %1649 = vmatpush1.msra.mxu0 0.0
    %1650 = vmatprep.subr.mxu0 0.0
    %1651 = vmatpush1.msra.mxu0 0.0
    %1652 = vmatprep.subr.mxu0 0.0
    %1653 = vmatpush1.msra.mxu0 0.0
    %1654 = vmatprep.subr.mxu0 0.0
    %1655 = vmatpush1.msra.mxu0 0.0
    %1656 = vmatprep.subr.mxu0 0.0
    %1657 = vmatpush1.msra.mxu0 0.0
    %1658 = vmatprep.subr.mxu0 0.0
    %1659 = vmatpush1.msra.mxu0 0.0
    %1660 = vmatprep.subr.mxu0 0.0
    %1661 = vmatpush1.msra.mxu0 0.0
    %1662 = vmatprep.subr.mxu0 0.0
    %1663 = vmatpush1.msra.mxu0 0.0
    %1664 = vmatprep.subr.mxu0 0.0
    %1665 = vmatpush1.msra.mxu0 0.0
    %1666 = vmatprep.subr.mxu0 0.0
    %1667 = vmatpush1.msra.mxu0 0.0
    %1668 = vmatprep.subr.mxu0 0.0
    %1669 = vmatpush1.msra.mxu0 0.0
    %1670 = vmatprep.subr.mxu0 0.0
    %1671 = vmatpush1.msra.mxu0 0.0
    %1672 = vmatprep.subr.mxu0 0.0
    %1673 = vmatpush1.msra.mxu0 0.0
    %1674 = vmatprep.subr.mxu0 0.0
    %1675 = vmatpush1.msra.mxu0 0.0
    %1676 = vmatprep.subr.mxu0 0.0
    %1677 = vmatpush1.msra.mxu0 0.0
    %1678 = vmatprep.subr.mxu0 0.0
    %1679 = vmatpush1.msra.mxu0 0.0
    %1680 = vmatprep.subr.mxu0 0.0
    %1681 = vmatpush1.msra.mxu0 0.0
    %1682 = vmatprep.subr.mxu0 0.0
    %1683 = vmatpush1.msra.mxu0 0.0
    %1684 = vmatprep.subr.mxu0 0.0
    %1685 = vmatpush1.msra.mxu0 0.0
    %1686 = vmatprep.subr.mxu0 0.0
    %1687 = vmatpush1.msra.mxu0 0.0
    %1688 = vmatprep.subr.mxu0 0.0
    %1689 = vmatpush1.msra.mxu0 0.0
    %1690 = vmatprep.subr.mxu0 0.0
    %1691 = vmatpush1.msra.mxu0 0.0
    %1692 = vmatprep.subr.mxu0 0.0
    %1693 = vmatpush1.msra.mxu0 0.0
    %1694 = vmatprep.subr.mxu0 0.0
    %1695 = vmatpush1.msra.mxu0 0.0
    %1696 = vmatprep.subr.mxu0 0.0
    %1697 = vmatpush1.msra.mxu0 0.0
    %1698 = vmatprep.subr.mxu0 0.0
    %1699 = vmatpush1.msra.mxu0 0.0
    %1700 = vmatprep.mubr.f32.mxu0 0.0
    %v1701 = vand.u32 %v1630, 4294901760
    %v1702 = vsub.f32 %v1630, %v1701
    %v1703 = vand.u32 %v1702, 4294901760
    %v1704 = vsub.f32 %v1702, %v1703
    %v1705 = vand.u32 %v1704, 4294901760
    %1706 = vmatmul.mubr.f32.gmra.mrb[0].mxu0 %v1705
    %v1707 = vpop.f32.mrb[0].mxu0
    %v1708 = vadd.f32 0.0, %v1707
    %v1709 = vpop.f32.mrb[0].mxu0
    %1710 = vdwg.mxu0
    %1711 = vmatprep.subr.mxu0 0.0
    %v1712 = vand.u32 %v1624, 4294901760
    %v1713 = vsub.f32 %v1624, %v1712
    %v1714 = vand.u32 %v1713, 4294901760
    %v1715 = vsub.f32 %v1713, %v1714
    %v1716 = vand.u32 %v1715, 4294901760
    %1717 = vmatpush1.msra.mxu0 %v1716
    %1718 = vmatprep.subr.mxu0 0.0
    %v1719 = vand.u32 %v1625, 4294901760
    %v1720 = vsub.f32 %v1625, %v1719
    %v1721 = vand.u32 %v1720, 4294901760
    %v1722 = vsub.f32 %v1720, %v1721
    %v1723 = vand.u32 %v1722, 4294901760
    %1724 = vmatpush1.msra.mxu0 %v1723
    %1725 = vmatprep.subr.mxu0 0.0
    %v1726 = vand.u32 %v1626, 4294901760
    %v1727 = vsub.f32 %v1626, %v1726
    %v1728 = vand.u32 %v1727, 4294901760
    %v1729 = vsub.f32 %v1727, %v1728
    %v1730 = vand.u32 %v1729, 4294901760
    %1731 = vmatpush1.msra.mxu0 %v1730
    %1732 = vmatprep.subr.mxu0 0.0
    %v1733 = vand.u32 %v1627, 4294901760
    %v1734 = vsub.f32 %v1627, %v1733
    %v1735 = vand.u32 %v1734, 4294901760
    %v1736 = vsub.f32 %v1734, %v1735
    %v1737 = vand.u32 %v1736, 4294901760
    %1738 = vmatpush1.msra.mxu0 %v1737
    %1739 = vmatprep.subr.mxu0 0.0
    %1740 = vmatpush1.msra.mxu0 0.0
    %1741 = vmatprep.subr.mxu0 0.0
    %1742 = vmatpush1.msra.mxu0 0.0
    %1743 = vmatprep.subr.mxu0 0.0
    %1744 = vmatpush1.msra.mxu0 0.0
    %1745 = vmatprep.subr.mxu0 0.0
    %1746 = vmatpush1.msra.mxu0 0.0
    %1747 = vmatprep.subr.mxu0 0.0
    %1748 = vmatpush1.msra.mxu0 0.0
    %1749 = vmatprep.subr.mxu0 0.0
    %1750 = vmatpush1.msra.mxu0 0.0
    %1751 = vmatprep.subr.mxu0 0.0
    %1752 = vmatpush1.msra.mxu0 0.0
    %1753 = vmatprep.subr.mxu0 0.0
    %1754 = vmatpush1.msra.mxu0 0.0
    %1755 = vmatprep.subr.mxu0 0.0
    %1756 = vmatpush1.msra.mxu0 0.0
    %1757 = vmatprep.subr.mxu0 0.0
    %1758 = vmatpush1.msra.mxu0 0.0
    %1759 = vmatprep.subr.mxu0 0.0
    %1760 = vmatpush1.msra.mxu0 0.0
    %1761 = vmatprep.subr.mxu0 0.0
    %1762 = vmatpush1.msra.mxu0 0.0
    %1763 = vmatprep.subr.mxu0 0.0
    %1764 = vmatpush1.msra.mxu0 0.0
    %1765 = vmatprep.subr.mxu0 0.0
    %1766 = vmatpush1.msra.mxu0 0.0
    %1767 = vmatprep.subr.mxu0 0.0
    %1768 = vmatpush1.msra.mxu0 0.0
    %1769 = vmatprep.subr.mxu0 0.0
    %1770 = vmatpush1.msra.mxu0 0.0
    %1771 = vmatprep.subr.mxu0 0.0
    %1772 = vmatpush1.msra.mxu0 0.0
    %1773 = vmatprep.subr.mxu0 0.0
    %1774 = vmatpush1.msra.mxu0 0.0
    %1775 = vmatprep.subr.mxu0 0.0
    %1776 = vmatpush1.msra.mxu0 0.0
    %1777 = vmatprep.subr.mxu0 0.0
    %1778 = vmatpush1.msra.mxu0 0.0
    %1779 = vmatprep.subr.mxu0 0.0
    %1780 = vmatpush1.msra.mxu0 0.0
    %1781 = vmatprep.subr.mxu0 0.0
    %1782 = vmatpush1.msra.mxu0 0.0
    %1783 = vmatprep.subr.mxu0 0.0
    %1784 = vmatpush1.msra.mxu0 0.0
    %1785 = vmatprep.subr.mxu0 0.0
    %1786 = vmatpush1.msra.mxu0 0.0
    %1787 = vmatprep.subr.mxu0 0.0
    %1788 = vmatpush1.msra.mxu0 0.0
    %1789 = vmatprep.subr.mxu0 0.0
    %1790 = vmatpush1.msra.mxu0 0.0
    %1791 = vmatprep.subr.mxu0 0.0
    %1792 = vmatpush1.msra.mxu0 0.0
    %1793 = vmatprep.subr.mxu0 0.0
    %1794 = vmatpush1.msra.mxu0 0.0
    %1795 = vmatprep.mubr.f32.mxu0 0.0
    %v1796 = vand.u32 %v1630, 4294901760
    %1797 = vmatmul.mubr.f32.gmra.mrb[0].mxu0 %v1796
    %v1798 = vpop.f32.mrb[0].mxu0
    %v1799 = vadd.f32 %v1708, %v1798
    %v1800 = vpop.f32.mrb[0].mxu0
    %1801 = vdwg.mxu0
    %1802 = vmatprep.subr.mxu0 0.0
    %v1803 = vand.u32 %v1624, 4294901760
    %v1804 = vsub.f32 %v1624, %v1803
    %1805 = vmatpush1.msra.mxu0 %v1804
    %1806 = vmatprep.subr.mxu0 0.0
    %v1807 = vand.u32 %v1625, 4294901760
    %v1808 = vsub.f32 %v1625, %v1807
    %1809 = vmatpush1.msra.mxu0 %v1808
    %1810 = vmatprep.subr.mxu0 0.0
    %v1811 = vand.u32 %v1626, 4294901760
    %v1812 = vsub.f32 %v1626, %v1811
    %1813 = vmatpush1.msra.mxu0 %v1812
    %1814 = vmatprep.subr.mxu0 0.0
    %v1815 = vand.u32 %v1627, 4294901760
    %v1816 = vsub.f32 %v1627, %v1815
    %1817 = vmatpush1.msra.mxu0 %v1816
    %1818 = vmatprep.subr.mxu0 0.0
    %1819 = vmatpush1.msra.mxu0 0.0
    %1820 = vmatprep.subr.mxu0 0.0
    %1821 = vmatpush1.msra.mxu0 0.0
    %1822 = vmatprep.subr.mxu0 0.0
    %1823 = vmatpush1.msra.mxu0 0.0
    %1824 = vmatprep.subr.mxu0 0.0
    %1825 = vmatpush1.msra.mxu0 0.0
    %1826 = vmatprep.subr.mxu0 0.0
    %1827 = vmatpush1.msra.mxu0 0.0
    %1828 = vmatprep.subr.mxu0 0.0
    %1829 = vmatpush1.msra.mxu0 0.0
    %1830 = vmatprep.subr.mxu0 0.0
    %1831 = vmatpush1.msra.mxu0 0.0
    %1832 = vmatprep.subr.mxu0 0.0
    %1833 = vmatpush1.msra.mxu0 0.0
    %1834 = vmatprep.subr.mxu0 0.0
    %1835 = vmatpush1.msra.mxu0 0.0
    %1836 = vmatprep.subr.mxu0 0.0
    %1837 = vmatpush1.msra.mxu0 0.0
    %1838 = vmatprep.subr.mxu0 0.0
    %1839 = vmatpush1.msra.mxu0 0.0
    %1840 = vmatprep.subr.mxu0 0.0
    %1841 = vmatpush1.msra.mxu0 0.0
    %1842 = vmatprep.subr.mxu0 0.0
    %1843 = vmatpush1.msra.mxu0 0.0
    %1844 = vmatprep.subr.mxu0 0.0
    %1845 = vmatpush1.msra.mxu0 0.0
    %1846 = vmatprep.subr.mxu0 0.0
    %1847 = vmatpush1.msra.mxu0 0.0
    %1848 = vmatprep.subr.mxu0 0.0
    %1849 = vmatpush1.msra.mxu0 0.0
    %1850 = vmatprep.subr.mxu0 0.0
    %1851 = vmatpush1.msra.mxu0 0.0
    %1852 = vmatprep.subr.mxu0 0.0
    %1853 = vmatpush1.msra.mxu0 0.0
    %1854 = vmatprep.subr.mxu0 0.0
    %1855 = vmatpush1.msra.mxu0 0.0
    %1856 = vmatprep.subr.mxu0 0.0
    %1857 = vmatpush1.msra.mxu0 0.0
    %1858 = vmatprep.subr.mxu0 0.0
    %1859 = vmatpush1.msra.mxu0 0.0
    %1860 = vmatprep.subr.mxu0 0.0
    %1861 = vmatpush1.msra.mxu0 0.0
    %1862 = vmatprep.subr.mxu0 0.0
    %1863 = vmatpush1.msra.mxu0 0.0
    %1864 = vmatprep.subr.mxu0 0.0
    %1865 = vmatpush1.msra.mxu0 0.0
    %1866 = vmatprep.subr.mxu0 0.0
    %1867 = vmatpush1.msra.mxu0 0.0
    %1868 = vmatprep.subr.mxu0 0.0
    %1869 = vmatpush1.msra.mxu0 0.0
    %1870 = vmatprep.subr.mxu0 0.0
    %1871 = vmatpush1.msra.mxu0 0.0
    %1872 = vmatprep.subr.mxu0 0.0
    %1873 = vmatpush1.msra.mxu0 0.0
    %1874 = vmatprep.mubr.f32.mxu0 0.0
    %v1875 = vand.u32 %v1630, 4294901760
    %v1876 = vsub.f32 %v1630, %v1875
    %1877 = vmatmul.mubr.f32.gmra.mrb[0].mxu0 %v1876
    %v1878 = vpop.f32.mrb[0].mxu0
    %v1879 = vadd.f32 %v1799, %v1878
    %v1880 = vpop.f32.mrb[0].mxu0
    %1881 = vdwg.mxu0
    %1882 = vmatprep.subr.mxu0 0.0
    %v1883 = vand.u32 %v1624, 4294901760
    %1884 = vmatpush1.msra.mxu0 %v1883
    %1885 = vmatprep.subr.mxu0 0.0
    %v1886 = vand.u32 %v1625, 4294901760
    %1887 = vmatpush1.msra.mxu0 %v1886
    %1888 = vmatprep.subr.mxu0 0.0
    %v1889 = vand.u32 %v1626, 4294901760
    %1890 = vmatpush1.msra.mxu0 %v1889
    %1891 = vmatprep.subr.mxu0 0.0
    %v1892 = vand.u32 %v1627, 4294901760
    %1893 = vmatpush1.msra.mxu0 %v1892
    %1894 = vmatprep.subr.mxu0 0.0
    %1895 = vmatpush1.msra.mxu0 0.0
    %1896 = vmatprep.subr.mxu0 0.0
    %1897 = vmatpush1.msra.mxu0 0.0
    %1898 = vmatprep.subr.mxu0 0.0
    %1899 = vmatpush1.msra.mxu0 0.0
    %1900 = vmatprep.subr.mxu0 0.0
    %1901 = vmatpush1.msra.mxu0 0.0
    %1902 = vmatprep.subr.mxu0 0.0
    %1903 = vmatpush1.msra.mxu0 0.0
    %1904 = vmatprep.subr.mxu0 0.0
    %1905 = vmatpush1.msra.mxu0 0.0
    %1906 = vmatprep.subr.mxu0 0.0
    %1907 = vmatpush1.msra.mxu0 0.0
    %1908 = vmatprep.subr.mxu0 0.0
    %1909 = vmatpush1.msra.mxu0 0.0
    %1910 = vmatprep.subr.mxu0 0.0
    %1911 = vmatpush1.msra.mxu0 0.0
    %1912 = vmatprep.subr.mxu0 0.0
    %1913 = vmatpush1.msra.mxu0 0.0
    %1914 = vmatprep.subr.mxu0 0.0
    %1915 = vmatpush1.msra.mxu0 0.0
    %1916 = vmatprep.subr.mxu0 0.0
    %1917 = vmatpush1.msra.mxu0 0.0
    %1918 = vmatprep.subr.mxu0 0.0
    %1919 = vmatpush1.msra.mxu0 0.0
    %1920 = vmatprep.subr.mxu0 0.0
    %1921 = vmatpush1.msra.mxu0 0.0
    %1922 = vmatprep.subr.mxu0 0.0
    %1923 = vmatpush1.msra.mxu0 0.0
    %1924 = vmatprep.subr.mxu0 0.0
    %1925 = vmatpush1.msra.mxu0 0.0
    %1926 = vmatprep.subr.mxu0 0.0
    %1927 = vmatpush1.msra.mxu0 0.0
    %1928 = vmatprep.subr.mxu0 0.0
    %1929 = vmatpush1.msra.mxu0 0.0
    %1930 = vmatprep.subr.mxu0 0.0
    %1931 = vmatpush1.msra.mxu0 0.0
    %1932 = vmatprep.subr.mxu0 0.0
    %1933 = vmatpush1.msra.mxu0 0.0
    %1934 = vmatprep.subr.mxu0 0.0
    %1935 = vmatpush1.msra.mxu0 0.0
    %1936 = vmatprep.subr.mxu0 0.0
    %1937 = vmatpush1.msra.mxu0 0.0
    %1938 = vmatprep.subr.mxu0 0.0
    %1939 = vmatpush1.msra.mxu0 0.0
    %1940 = vmatprep.subr.mxu0 0.0
    %1941 = vmatpush1.msra.mxu0 0.0
    %1942 = vmatprep.subr.mxu0 0.0
    %1943 = vmatpush1.msra.mxu0 0.0
    %1944 = vmatprep.subr.mxu0 0.0
    %1945 = vmatpush1.msra.mxu0 0.0
    %1946 = vmatprep.subr.mxu0 0.0
    %1947 = vmatpush1.msra.mxu0 0.0
    %1948 = vmatprep.subr.mxu0 0.0
    %1949 = vmatpush1.msra.mxu0 0.0
    %1950 = vmatprep.mubr.f32.mxu0 0.0
    %v1951 = vand.u32 %v1630, 4294901760
    %v1952 = vsub.f32 %v1630, %v1951
    %v1953 = vand.u32 %v1952, 4294901760
    %1954 = vmatmul.mubr.f32.gmra.mrb[0].mxu0 %v1953
    %v1955 = vpop.f32.mrb[0].mxu0
    %v1956 = vadd.f32 %v1879, %v1955
    %v1957 = vpop.f32.mrb[0].mxu0
    %1958 = vdwg.mxu0
    %1959 = vmatprep.subr.mxu0 0.0
    %v1960 = vand.u32 %v1624, 4294901760
    %v1961 = vsub.f32 %v1624, %v1960
    %v1962 = vand.u32 %v1961, 4294901760
    %1963 = vmatpush1.msra.mxu0 %v1962
    %1964 = vmatprep.subr.mxu0 0.0
    %v1965 = vand.u32 %v1625, 4294901760
    %v1966 = vsub.f32 %v1625, %v1965
    %v1967 = vand.u32 %v1966, 4294901760
    %1968 = vmatpush1.msra.mxu0 %v1967
    %1969 = vmatprep.subr.mxu0 0.0
    %v1970 = vand.u32 %v1626, 4294901760
    %v1971 = vsub.f32 %v1626, %v1970
    %v1972 = vand.u32 %v1971, 4294901760
    %1973 = vmatpush1.msra.mxu0 %v1972
    %1974 = vmatprep.subr.mxu0 0.0
    %v1975 = vand.u32 %v1627, 4294901760
    %v1976 = vsub.f32 %v1627, %v1975
    %v1977 = vand.u32 %v1976, 4294901760
    %1978 = vmatpush1.msra.mxu0 %v1977
    %1979 = vmatprep.subr.mxu0 0.0
    %1980 = vmatpush1.msra.mxu0 0.0
    %1981 = vmatprep.subr.mxu0 0.0
    %1982 = vmatpush1.msra.mxu0 0.0
    %1983 = vmatprep.subr.mxu0 0.0
    %1984 = vmatpush1.msra.mxu0 0.0
    %1985 = vmatprep.subr.mxu0 0.0
    %1986 = vmatpush1.msra.mxu0 0.0
    %1987 = vmatprep.subr.mxu0 0.0
    %1988 = vmatpush1.msra.mxu0 0.0
    %1989 = vmatprep.subr.mxu0 0.0
    %1990 = vmatpush1.msra.mxu0 0.0
    %1991 = vmatprep.subr.mxu0 0.0
    %1992 = vmatpush1.msra.mxu0 0.0
    %1993 = vmatprep.subr.mxu0 0.0
    %1994 = vmatpush1.msra.mxu0 0.0
    %1995 = vmatprep.subr.mxu0 0.0
    %1996 = vmatpush1.msra.mxu0 0.0
    %1997 = vmatprep.subr.mxu0 0.0
    %1998 = vmatpush1.msra.mxu0 0.0
    %1999 = vmatprep.subr.mxu0 0.0
    %2000 = vmatpush1.msra.mxu0 0.0
    %2001 = vmatprep.subr.mxu0 0.0
    %2002 = vmatpush1.msra.mxu0 0.0
    %2003 = vmatprep.subr.mxu0 0.0
    %2004 = vmatpush1.msra.mxu0 0.0
    %2005 = vmatprep.subr.mxu0 0.0
    %2006 = vmatpush1.msra.mxu0 0.0
    %2007 = vmatprep.subr.mxu0 0.0
    %2008 = vmatpush1.msra.mxu0 0.0
    %2009 = vmatprep.subr.mxu0 0.0
    %2010 = vmatpush1.msra.mxu0 0.0
    %2011 = vmatprep.subr.mxu0 0.0
    %2012 = vmatpush1.msra.mxu0 0.0
    %2013 = vmatprep.subr.mxu0 0.0
    %2014 = vmatpush1.msra.mxu0 0.0
    %2015 = vmatprep.subr.mxu0 0.0
    %2016 = vmatpush1.msra.mxu0 0.0
    %2017 = vmatprep.subr.mxu0 0.0
    %2018 = vmatpush1.msra.mxu0 0.0
    %2019 = vmatprep.subr.mxu0 0.0
    %2020 = vmatpush1.msra.mxu0 0.0
    %2021 = vmatprep.subr.mxu0 0.0
    %2022 = vmatpush1.msra.mxu0 0.0
    %2023 = vmatprep.subr.mxu0 0.0
    %2024 = vmatpush1.msra.mxu0 0.0
    %2025 = vmatprep.subr.mxu0 0.0
    %2026 = vmatpush1.msra.mxu0 0.0
    %2027 = vmatprep.subr.mxu0 0.0
    %2028 = vmatpush1.msra.mxu0 0.0
    %2029 = vmatprep.subr.mxu0 0.0
    %2030 = vmatpush1.msra.mxu0 0.0
    %2031 = vmatprep.subr.mxu0 0.0
    %2032 = vmatpush1.msra.mxu0 0.0
    %2033 = vmatprep.subr.mxu0 0.0
    %2034 = vmatpush1.msra.mxu0 0.0
    %2035 = vmatprep.mubr.f32.mxu0 0.0
    %v2036 = vand.u32 %v1630, 4294901760
    %2037 = vmatmul.mubr.f32.gmra.mrb[0].mxu0 %v2036
    %v2038 = vpop.f32.mrb[0].mxu0
    %v2039 = vadd.f32 %v1956, %v2038
    %v2040 = vpop.f32.mrb[0].mxu0
    %2041 = vdwg.mxu0
    %2042 = vmatprep.subr.mxu0 0.0
    %v2043 = vand.u32 %v1624, 4294901760
    %2044 = vmatpush1.msra.mxu0 %v2043
    %2045 = vmatprep.subr.mxu0 0.0
    %v2046 = vand.u32 %v1625, 4294901760
    %2047 = vmatpush1.msra.mxu0 %v2046
    %2048 = vmatprep.subr.mxu0 0.0
    %v2049 = vand.u32 %v1626, 4294901760
    %2050 = vmatpush1.msra.mxu0 %v2049
    %2051 = vmatprep.subr.mxu0 0.0
    %v2052 = vand.u32 %v1627, 4294901760
    %2053 = vmatpush1.msra.mxu0 %v2052
    %2054 = vmatprep.subr.mxu0 0.0
    %2055 = vmatpush1.msra.mxu0 0.0
    %2056 = vmatprep.subr.mxu0 0.0
    %2057 = vmatpush1.msra.mxu0 0.0
    %2058 = vmatprep.subr.mxu0 0.0
    %2059 = vmatpush1.msra.mxu0 0.0
    %2060 = vmatprep.subr.mxu0 0.0
    %2061 = vmatpush1.msra.mxu0 0.0
    %2062 = vmatprep.subr.mxu0 0.0
    %2063 = vmatpush1.msra.mxu0 0.0
    %2064 = vmatprep.subr.mxu0 0.0
    %2065 = vmatpush1.msra.mxu0 0.0
    %2066 = vmatprep.subr.mxu0 0.0
    %2067 = vmatpush1.msra.mxu0 0.0
    %2068 = vmatprep.subr.mxu0 0.0
    %2069 = vmatpush1.msra.mxu0 0.0
    %2070 = vmatprep.subr.mxu0 0.0
    %2071 = vmatpush1.msra.mxu0 0.0
    %2072 = vmatprep.subr.mxu0 0.0
    %2073 = vmatpush1.msra.mxu0 0.0
    %2074 = vmatprep.subr.mxu0 0.0
    %2075 = vmatpush1.msra.mxu0 0.0
    %2076 = vmatprep.subr.mxu0 0.0
    %2077 = vmatpush1.msra.mxu0 0.0
    %2078 = vmatprep.subr.mxu0 0.0
    %2079 = vmatpush1.msra.mxu0 0.0
    %2080 = vmatprep.subr.mxu0 0.0
    %2081 = vmatpush1.msra.mxu0 0.0
    %2082 = vmatprep.subr.mxu0 0.0
    %2083 = vmatpush1.msra.mxu0 0.0
    %2084 = vmatprep.subr.mxu0 0.0
    %2085 = vmatpush1.msra.mxu0 0.0
    %2086 = vmatprep.subr.mxu0 0.0
    %2087 = vmatpush1.msra.mxu0 0.0
    %2088 = vmatprep.subr.mxu0 0.0
    %2089 = vmatpush1.msra.mxu0 0.0
    %2090 = vmatprep.subr.mxu0 0.0
    %2091 = vmatpush1.msra.mxu0 0.0
    %2092 = vmatprep.subr.mxu0 0.0
    %2093 = vmatpush1.msra.mxu0 0.0
    %2094 = vmatprep.subr.mxu0 0.0
    %2095 = vmatpush1.msra.mxu0 0.0
    %2096 = vmatprep.subr.mxu0 0.0
    %2097 = vmatpush1.msra.mxu0 0.0
    %2098 = vmatprep.subr.mxu0 0.0
    %2099 = vmatpush1.msra.mxu0 0.0
    %2100 = vmatprep.subr.mxu0 0.0
    %2101 = vmatpush1.msra.mxu0 0.0
    %2102 = vmatprep.subr.mxu0 0.0
    %2103 = vmatpush1.msra.mxu0 0.0
    %2104 = vmatprep.subr.mxu0 0.0
    %2105 = vmatpush1.msra.mxu0 0.0
    %2106 = vmatprep.subr.mxu0 0.0
    %2107 = vmatpush1.msra.mxu0 0.0
    %2108 = vmatprep.subr.mxu0 0.0
    %2109 = vmatpush1.msra.mxu0 0.0
    %2110 = vmatprep.mubr.f32.mxu0 0.0
    %v2111 = vand.u32 %v1630, 4294901760
    %2112 = vmatmul.mubr.f32.gmra.mrb[0].mxu0 %v2111
    %v2113 = vpop.f32.mrb[0].mxu0
    %v2114 = vadd.f32 %v2039, %v2113
    %v2115 = vpop.f32.mrb[0].mxu0
    %2116 = vdwg.mxu0
    %2117 = vst [vmem:[#allocation2] sm:$0xf] %v2114
    // Predicated region
    $region18: #{tpu_custom_call.1} parent=1 // pred_check
      _
    $region19: #{tpu_custom_call.1} parent=1 // pred_check_branch
      %2119 = sbr.rel (0) target = $region21
    $region20: #{tpu_custom_call.1} parent=1 // pred_region
      %s2121 = ssub.s32 64, 64
      %2122 = vsyncadd [#allocation3], %s2121
      %s2124 = sshll.u32 [#allocation2], 4
      %s2125 = int_to_ptr.vmem [resolvable:$true] %s2124
      %2127 = dma.vmem_to_hbm [thread:$0]  %s2125, 64, %s4, [#allocation3]
    $region21: #{tpu_custom_call.1} parent=1 // pred_fallthru
      _
    // Predicated region
    $region22: #{tpu_custom_call.1} parent=1 // pred_check
      _
    $region23: #{tpu_custom_call.1} parent=1 // pred_check_branch
      %2129 = sbr.rel (0) target = $region25
    $region24: #{tpu_custom_call.1} parent=1 // pred_region
      %2130 = dma.done [#allocation3], 64
    $region25: #{tpu_custom_call.1} parent=1 // pred_fallthru
      _
    %2131 = vsyncpa [#allocation3], 1

</llo_original>
